<compile_context>
chip_gen: v7x
topology: tpu7x:2x2x1
jax: 0.10.0
libtpu: 0.0.40
codegen_flags: <defaults>
</compile_context>

<pallas_src>
import functools

import jax
import jax.numpy as jnp
import numpy as np
from jax import lax
from jax.experimental import pallas as pl
from jax.experimental.pallas import tpu as pltpu


# ----------------------------- small helpers -------------------------------

def _act(v, act):
    if act == "hswish":
        return v * jnp.clip(v + 3.0, 0.0, 6.0) * (1.0 / 6.0)
    return jnp.maximum(v, 0.0)  # relu


def _ds(start, size, stride):
    return pl.ds(start, size) if stride == 1 else pl.ds(start, size, stride)


def _pick_tile(n, cap):
    """Largest divisor of n that is <= cap (exact tiling, no ragged tiles)."""
    t = max(1, min(n, cap))
    while n % t:
        t -= 1
    return t


def _padded_bytes(shape, itemsize=4):
    s = [max(int(d), 1) for d in shape]
    if len(s) >= 1:
        s[-1] = -(-s[-1] // 128) * 128
    if len(s) >= 2:
        s[-2] = -(-s[-2] // 8) * 8
    n = 1
    for d in s:
        n *= d
    return n * itemsize


def _vmem_limit(block_shapes, scratch_shapes=()):
    est = 2 * sum(_padded_bytes(s) for s in block_shapes)      # double-buffered blocks
    est += sum(_padded_bytes(s) for s in scratch_shapes)
    est = 3 * est + (8 << 20)                                   # headroom for temporaries
    return int(min(max(est, 16 << 20), 64 << 20))               # <= v7x physical VMEM


# ------------------------------ Pallas kernels ------------------------------

def front_kernel(x_ref, w1_ref, b1_ref, wd1_ref, bd1_ref, wd2_ref, bd2_ref,
                 o1_ref, o2_ref, ps1_ref, ps2_ref, y1_ref,
                 *, K, pad, pad_l, stride, act):
    """Fused conv1 (1x1 + folded BN + NL) + depthwise (1,K) + depthwise (K,1)
    (+folded BN) for one (batch, H-tile) grid step, reading x in native NCHW.

    Emits the two pre-SE / pre-activation channel halves plus per-tile SE
    pooling partial sums (SE scale + NL are applied later, inside conv2)."""
    _, inC, H, W = x_ref.shape
    _, TH_out, W_out, exp = o1_ref.shape
    TH_main = (TH_out - 1) * stride + 1          # contiguous input rows strictly needed
    TH_halo = y1_ref.shape[0]                    # TH_main + 2*pad

    h_idx = pl.program_id(1)
    row0 = h_idx * (TH_out * stride)             # first main input row of this tile
    if (TH_out * stride) % 8 == 0:
        row0 = pl.multiple_of(row0, 8)
    ir0 = row0 - pad                             # input row of staging row 0 (may be < 0)

    # Hoisted weight/bias loads (reused across taps / halo rows).
    w1 = w1_ref[...]                             # (inC, exp)
    b1 = b1_ref[...]                             # (1, exp)
    wd1 = wd1_ref[...]                           # (K, exp)
    wd2 = wd2_ref[...]                           # (K, exp)
    cdims = (((0,), (0,)), ((), ()))             # contract the channel dim of x with w1

    # Zero only the W-halo columns the taps actually read (interior rewritten below).
    if pad > 0:
        y1_ref[:, pl.ds(pad_l - pad, pad), :] = jnp.zeros((TH_halo, pad, exp), jnp.float32)
        y1_ref[:, pl.ds(pad_l + W, pad), :] = jnp.zeros((TH_halo, pad, exp), jnp.float32)

    # ---- conv1 + NL for the main rows: one MXU matmul over (TH_main*W, inC) ----
    xs = x_ref[0, :, pl.ds(row0, TH_main), :]                       # (inC, TH_main, W)
    y = lax.dot_general(xs.reshape(inC, TH_main * W), w1, cdims,
                        preferred_element_type=jnp.float32)          # (TH_main*W, exp)
    y = _act(y + b1, act)
    y1_ref[pl.ds(pad, TH_main), pl.ds(pad_l, W), :] = y.reshape(TH_main, W, exp)

    # ---- conv1 + NL for the (<= 2*pad) H-halo rows: recomputed, zero off-image ----
    for i in list(range(pad)) + list(range(pad + TH_main, TH_halo)):
        ir = ir0 + i                                                 # absolute input row
        irc = jnp.clip(ir, 0, H - 1)
        xrow = x_ref[0, :, pl.ds(irc, 1), :][:, 0, :]                # (inC, W)
        yrow = lax.dot_general(xrow, w1, cdims,
                               preferred_element_type=jnp.float32)   # (W, exp)
        yrow = _act(yrow + b1, act)
        valid = jnp.logical_and(ir >= 0, ir < H)
        y1_ref[i, pl.ds(pad_l, W), :] = jnp.where(valid, yrow, 0.0)

    # ---- depthwise (1,K) along W and (K,1) along H: taps read straight from ref ----
    acc1 = jnp.zeros((TH_out, W_out, exp), jnp.float32)
    acc2 = jnp.zeros((TH_out, W_out, exp), jnp.float32)
    r1 = _ds(pad, TH_out, stride)                # dw1 sampled rows (static window)
    c2 = _ds(pad_l, W_out, stride)               # dw2 sampled cols (static window)
    for k in range(K):                           # static unroll over taps
        v1 = y1_ref[r1, _ds(pad_l - pad + k, W_out, stride), :]
        acc1 = acc1 + v1 * wd1[k]
        v2 = y1_ref[_ds(k, TH_out, stride), c2, :]
        acc2 = acc2 + v2 * wd2[k]
    out1 = acc1 + bd1_ref[...]                   # pre-SE, pre-activation
    out2 = acc2 + bd2_ref[...]

    o1_ref[0] = out1
    o2_ref[0] = out2
    # Per-tile SE pooling partial sums (reduced over tiles in the wrapper).
    ps1_ref[0, 0] = jnp.broadcast_to(jnp.sum(out1, axis=(0, 1))[None, :], (8, exp))
    ps2_ref[0, 0] = jnp.broadcast_to(jnp.sum(out2, axis=(0, 1))[None, :], (8, exp))


def conv2_kernel(x1_ref, x2_ref, p1_ref, p2_ref, wse1a_ref, wse1b_ref,
                 wse2a_ref, wse2b_ref, w2a_ref, w2b_ref, b_ref, o_ref,
                 *, act, is_SE):
    """SE scale + nonlinearity prologue, then conv2 (1x1 over the virtual
    concatenated channels) as x1 @ w2[:exp] + x2 @ w2[exp:], emitted transposed
    so the lane axis is spatial (lane-dense stores, NCHW output)."""
    x1 = x1_ref[0]                               # (tmo, exp)
    x2 = x2_ref[0]
    if is_SE:
        h = (jnp.dot(p1_ref[0], wse1a_ref[...], preferred_element_type=jnp.float32)
             + jnp.dot(p2_ref[0], wse1b_ref[...], preferred_element_type=jnp.float32))
        h = jnp.maximum(h, 0.0)
        se1 = jnp.clip(jnp.dot(h, wse2a_ref[...], preferred_element_type=jnp.float32)
                       + 3.0, 0.0, 6.0) * (1.0 / 6.0)
        se2 = jnp.clip(jnp.dot(h, wse2b_ref[...], preferred_element_type=jnp.float32)
                       + 3.0, 0.0, 6.0) * (1.0 / 6.0)
        x1 = x1 * se1                            # (tmo, exp) * (1, exp)
        x2 = x2 * se2
    x1 = _act(x1, act)
    x2 = _act(x2, act)
    dn = (((1,), (1,)), ((), ()))                # contract channel dim of both operands
    y = lax.dot_general(w2a_ref[...], x1, dn, preferred_element_type=jnp.float32)
    y = y + lax.dot_general(w2b_ref[...], x2, dn, preferred_element_type=jnp.float32)
    o_ref[0] = y + b_ref[...]                    # b is (oup, 1), broadcasts over lanes


# --------------------------------- wrapper ----------------------------------

def fuse_forward(x_nchw, p, *, K, stride, is_SE, nl):
    """x_nchw: (B, inC, H, W) float32 — PyTorch layout in, NCHW layout out."""
    f32 = jnp.float32
    B, inC, H, W = x_nchw.shape
    exp = p["w1"].shape[1]
    oup = p["w2"].shape[1]
    pad = (K - 1) // 2
    pad_l = 8 if pad > 0 else 0                  # sublane-aligned left W-halo
    H_out = (H - 1) // stride + 1
    W_out = (W - 1) // stride + 1

    # ---- fold BN scales into conv weights (one-time algebraic fold) ----
    w1f = (p["w1"] * p["bn1_s"]).astype(f32)     # (inC, exp)
    b1 = p["bn1_b"].astype(f32)                  # (1, exp)
    wd1f = (p["wd1"] * p["bnd1_s"]).astype(f32)  # (K, exp)
    wd2f = (p["wd2"] * p["bnd2_s"]).astype(f32)  # (K, exp)
    bd1 = p["bnd1_b"].astype(f32)
    bd2 = p["bnd2_b"].astype(f32)
    w2f = p["w2"] * p["bn2_s"]                   # (2*exp, oup)
    w2a_t = jnp.transpose(w2f[:exp]).astype(f32)  # (oup, exp)
    w2b_t = jnp.transpose(w2f[exp:]).astype(f32)  # (oup, exp)
    b2 = p["bn2_b"].reshape(oup, 1).astype(f32)   # (oup, 1)
    if is_SE:
        wse1a = p["w_se1"][:exp].astype(f32)      # (exp, r)
        wse1b = p["w_se1"][exp:].astype(f32)      # (exp, r)
        wse2a = p["w_se2"][:, :exp].astype(f32)   # (r, exp)
        wse2b = p["w_se2"][:, exp:].astype(f32)   # (r, exp)
    else:
        wse1a = wse1b = jnp.zeros((exp, 1), f32)  # dummies (never read)
        wse2a = wse2b = jnp.zeros((1, exp), f32)

    # ---- H-tiling of the fused front kernel ----
    TH_out = _pick_tile(H_out, 8)                # output rows per grid step
    NH = H_out // TH_out
    TH_main = (TH_out - 1) * stride + 1
    TH_halo = TH_main + 2 * pad
    Wp = pad_l + W + pad

    x = x_nchw.astype(f32)
    dw_shape = jax.ShapeDtypeStruct((B, H_out, W_out, exp), f32)
    ps_shape = jax.ShapeDtypeStruct((B, NH, 8, exp), f32)

    blocks_a = [(1, inC, H, W), (inC, exp), (1, exp), (K, exp), (1, exp), (K, exp),
                (1, exp), (1, TH_out, W_out, exp), (1, TH_out, W_out, exp),
                (1, 1, 8, exp), (1, 1, 8, exp)]
    # TODO(synk): if inC*H*W grows very large, also tile the resident x block over H.
    out1, out2, ps1, ps2 = pl.pallas_call(
        functools.partial(front_kernel, K=K, pad=pad, pad_l=pad_l,
                          stride=stride, act=nl),
        out_shape=(dw_shape, dw_shape, ps_shape, ps_shape),
        grid=(B, NH),
        in_specs=[
            pl.BlockSpec((1, inC, H, W), lambda b, h: (b, 0, 0, 0)),   # resident per b
            pl.BlockSpec((inC, exp), lambda b, h: (0, 0)),
            pl.BlockSpec((1, exp), lambda b, h: (0, 0)),
            pl.BlockSpec((K, exp), lambda b, h: (0, 0)),
            pl.BlockSpec((1, exp), lambda b, h: (0, 0)),
            pl.BlockSpec((K, exp), lambda b, h: (0, 0)),
            pl.BlockSpec((1, exp), lambda b, h: (0, 0)),
        ],
        out_specs=(
            pl.BlockSpec((1, TH_out, W_out, exp), lambda b, h: (b, h, 0, 0)),
            pl.BlockSpec((1, TH_out, W_out, exp), lambda b, h: (b, h, 0, 0)),
            pl.BlockSpec((1, 1, 8, exp), lambda b, h: (b, h, 0, 0)),
            pl.BlockSpec((1, 1, 8, exp), lambda b, h: (b, h, 0, 0)),
        ),
        scratch_shapes=[pltpu.VMEM((TH_halo, Wp, exp), f32)],
        compiler_params=pltpu.CompilerParams(
            dimension_semantics=("parallel", "parallel"),
            vmem_limit_bytes=_vmem_limit(blocks_a, [(TH_halo, Wp, exp)])),
    )(x, w1f, b1, wd1f, bd1, wd2f, bd2)

    # ---- tiny glue: reduce per-tile SE pooling partial sums (plain JAX) ----
    Mo = H_out * W_out
    x1 = out1.reshape(B, Mo, exp)
    x2 = out2.reshape(B, Mo, exp)
    if is_SE:
        inv = 1.0 / float(Mo)
        pooled1 = (ps1[:, :, 0, :].sum(axis=1) * inv).reshape(B, 1, exp)
        pooled2 = (ps2[:, :, 0, :].sum(axis=1) * inv).reshape(B, 1, exp)
    else:
        pooled1 = jnp.zeros((B, 1, exp), f32)
        pooled2 = jnp.zeros((B, 1, exp), f32)

    # ---- conv2: SE scale + NL prologue, then 1x1 conv; lane-dense (B, oup, Mo) ----
    tmo = Mo if Mo <= 8192 else 8192
    NM = -(-Mo // tmo)
    blocks_b = [(1, tmo, exp), (1, tmo, exp), (1, 1, exp), (1, 1, exp),
                wse1a.shape, wse1b.shape, wse2a.shape, wse2b.shape,
                (oup, exp), (oup, exp), (oup, 1), (1, oup, tmo)]
    out = pl.pallas_call(
        functools.partial(conv2_kernel, act=nl, is_SE=is_SE),
        out_shape=jax.ShapeDtypeStruct((B, oup, Mo), f32),
        grid=(B, NM),
        in_specs=[
            pl.BlockSpec((1, tmo, exp), lambda b, m: (b, m, 0)),
            pl.BlockSpec((1, tmo, exp), lambda b, m: (b, m, 0)),
            pl.BlockSpec((1, 1, exp), lambda b, m: (b, 0, 0)),
            pl.BlockSpec((1, 1, exp), lambda b, m: (b, 0, 0)),
            pl.BlockSpec(wse1a.shape, lambda b, m: (0, 0)),
            pl.BlockSpec(wse1b.shape, lambda b, m: (0, 0)),
            pl.BlockSpec(wse2a.shape, lambda b, m: (0, 0)),
            pl.BlockSpec(wse2b.shape, lambda b, m: (0, 0)),
            pl.BlockSpec((oup, exp), lambda b, m: (0, 0)),
            pl.BlockSpec((oup, exp), lambda b, m: (0, 0)),
            pl.BlockSpec((oup, 1), lambda b, m: (0, 0)),
        ],
        out_specs=pl.BlockSpec((1, oup, tmo), lambda b, m: (b, 0, m)),
        compiler_params=pltpu.CompilerParams(
            dimension_semantics=("parallel", "parallel"),
            vmem_limit_bytes=_vmem_limit(blocks_b)),
    )(x1, x2, pooled1, pooled2, wse1a, wse1b, wse2a, wse2b, w2a_t, w2b_t, b2)
    return out.reshape(B, oup, H_out, W_out)     # NCHW, like PyTorch


# ---------------------------- pure-JAX reference -----------------------------

def reference(x, p, *, K, stride, is_SE, nl):
    """NHWC reference built from lax convs (no Pallas)."""
    pad = (K - 1) // 2
    act = (lambda v: v * jnp.clip(v + 3.0, 0.0, 6.0) / 6.0) if nl == "hswish" \
        else (lambda v: jnp.maximum(v, 0.0))
    dn = ("NHWC", "HWIO", "NHWC")
    exp = p["w1"].shape[1]

    y = lax.conv_general_dilated(x, p["w1"][None, None], (1, 1), "VALID",
                                 dimension_numbers=dn)
    y = act(y * p["bn1_s"] + p["bn1_b"])
    o1 = lax.conv_general_dilated(y, p["wd1"][None, :, None, :], (stride, stride),
                                  ((0, 0), (pad, pad)), dimension_numbers=dn,
                                  feature_group_count=exp)
    o1 = o1 * p["bnd1_s"] + p["bnd1_b"]
    o2 = lax.conv_general_dilated(y, p["wd2"][:, None, None, :], (stride, stride),
                                  ((pad, pad), (0, 0)), dimension_numbers=dn,
                                  feature_group_count=exp)
    o2 = o2 * p["bnd2_s"] + p["bnd2_b"]
    xc = jnp.concatenate([o1, o2], axis=-1)
    if is_SE:
        pooled = jnp.mean(xc, axis=(1, 2))
        h = jnp.maximum(pooled @ p["w_se1"], 0.0)
        se = jnp.clip(h @ p["w_se2"] + 3.0, 0.0, 6.0) / 6.0
        xc = xc * se[:, None, None, :]
    xc = act(xc)
    out = lax.conv_general_dilated(xc, p["w2"][None, None], (1, 1), "VALID",
                                   dimension_numbers=dn)
    return out * p["bn2_s"] + p["bn2_b"]


# ---------------------------------- main -------------------------------------

def make_params(key, inC, exp, oup, K, is_SE):
    ks = jax.random.split(key, 14)
    n = lambda k, s, sc=0.1: (sc * jax.random.normal(k, s)).astype(jnp.float32)
    bn = lambda k1, k2, c: (1.0 + n(k1, (1, c)), n(k2, (1, c)))  # folded scale, bias
    p = {}
    p["w1"] = n(ks[0], (inC, exp))                      # 1x1 conv inC->exp
    p["bn1_s"], p["bn1_b"] = bn(ks[1], ks[2], exp)
    p["wd1"] = n(ks[3], (K, exp))                       # depthwise (1,K) weights
    p["bnd1_s"], p["bnd1_b"] = bn(ks[4], ks[5], exp)
    p["wd2"] = n(ks[6], (K, exp))                       # depthwise (K,1) weights
    p["bnd2_s"], p["bnd2_b"] = bn(ks[7], ks[8], exp)
    C2 = 2 * exp
    if is_SE:
        p["w_se1"] = n(ks[9], (C2, C2 // 4))            # Linear (no bias)
        p["w_se2"] = n(ks[10], (C2 // 4, C2))
    p["w2"] = n(ks[11], (C2, oup))                      # 1x1 conv 2*exp->oup
    p["bn2_s"], p["bn2_b"] = bn(ks[12], ks[13], oup)
    return p


if __name__ == "__main__":
    # Module config: Fuse(inC=4, K=3, exp=16, oup=8, is_SE=True, NL='hswish', stride=1)
    B, inC, H, W = 2, 4, 16, 16
    K, exp, oup, stride, is_SE, nl = 3, 16, 8, 1, True, "hswish"

    key = jax.random.PRNGKey(0)
    kx, kp = jax.random.split(key)
    x_nchw = jax.random.normal(kx, (B, inC, H, W), jnp.float32)   # NCHW, like PyTorch
    params = make_params(kp, inC, exp, oup, K, is_SE)

    out = fuse_forward(x_nchw, params, K=K, stride=stride, is_SE=is_SE, nl=nl)
    out = jax.block_until_ready(out)

    x_nhwc = jnp.transpose(x_nchw, (0, 2, 3, 1))
    ref_nhwc = reference(x_nhwc, params, K=K, stride=stride, is_SE=is_SE, nl=nl)
    ref_nchw = jax.block_until_ready(jnp.transpose(ref_nhwc, (0, 3, 1, 2)))

    np.testing.assert_allclose(np.asarray(out), np.asarray(ref_nchw),
                               rtol=2e-4, atol=2e-4)
    print("KERNEL_OK")
</pallas_src>

<mosaic_0001>
module attributes {stable_mosaic.version = 11 : i64} {
  func.func @front_kernel(%arg0: i32, %arg1: i32, %arg2: memref<1x4x16x16xf32, #tpu.memory_space<vmem>>, %arg3: memref<4x16xf32, #tpu.memory_space<vmem>>, %arg4: memref<1x16xf32, #tpu.memory_space<vmem>>, %arg5: memref<3x16xf32, #tpu.memory_space<vmem>>, %arg6: memref<1x16xf32, #tpu.memory_space<vmem>>, %arg7: memref<3x16xf32, #tpu.memory_space<vmem>>, %arg8: memref<1x16xf32, #tpu.memory_space<vmem>>, %arg9: memref<1x8x16x16xf32, #tpu.memory_space<vmem>>, %arg10: memref<1x8x16x16xf32, #tpu.memory_space<vmem>>, %arg11: memref<1x1x8x16xf32, #tpu.memory_space<vmem>>, %arg12: memref<1x1x8x16xf32, #tpu.memory_space<vmem>>, %arg13: memref<10x25x16xf32, #tpu.memory_space<vmem>>) attributes {dimension_semantics = [#tpu.dimension_semantics<parallel>, #tpu.dimension_semantics<parallel>], iteration_bounds = array<i64: 2, 2>, scalar_prefetch = 0 : i64, scratch_operands = 1 : i64, tpu.core_type = #tpu.core_type<tc>, window_params = [{transform_indices = @transform_0, window_bounds = array<i64: 1, 4, 16, 16>}, {pipeline_mode = #tpu.pipeline_mode<synchronous>, transform_indices = @transform_1, window_bounds = array<i64: 4, 16>}, {pipeline_mode = #tpu.pipeline_mode<synchronous>, transform_indices = @transform_2, window_bounds = array<i64: 1, 16>}, {pipeline_mode = #tpu.pipeline_mode<synchronous>, transform_indices = @transform_3, window_bounds = array<i64: 3, 16>}, {pipeline_mode = #tpu.pipeline_mode<synchronous>, transform_indices = @transform_4, window_bounds = array<i64: 1, 16>}, {pipeline_mode = #tpu.pipeline_mode<synchronous>, transform_indices = @transform_5, window_bounds = array<i64: 3, 16>}, {pipeline_mode = #tpu.pipeline_mode<synchronous>, transform_indices = @transform_6, window_bounds = array<i64: 1, 16>}, {transform_indices = @transform_7, window_bounds = array<i64: 1, 8, 16, 16>}, {transform_indices = @transform_8, window_bounds = array<i64: 1, 8, 16, 16>}, {transform_indices = @transform_9, window_bounds = array<i64: 1, 1, 8, 16>}, {transform_indices = @transform_10, window_bounds = array<i64: 1, 1, 8, 16>}]} {
    %c8_i32 = arith.constant 8 : i32
    %0 = arith.muli %arg1, %c8_i32 : i32
    %1 = tpu.assume_multiple %0, 8 : i32
    %c1_i32 = arith.constant 1 : i32
    %2 = arith.subi %1, %c1_i32 : i32
    %c0 = arith.constant 0 : index
    %c0_0 = arith.constant 0 : index
    %3 = vector.load %arg3[%c0, %c0_0] : memref<4x16xf32, #tpu.memory_space<vmem>>, vector<4x16xf32>
    %c0_1 = arith.constant 0 : index
    %c0_2 = arith.constant 0 : index
    %4 = vector.load %arg4[%c0_1, %c0_2] : memref<1x16xf32, #tpu.memory_space<vmem>>, vector<1x16xf32>
    %c0_3 = arith.constant 0 : index
    %c0_4 = arith.constant 0 : index
    %5 = vector.load %arg5[%c0_3, %c0_4] : memref<3x16xf32, #tpu.memory_space<vmem>>, vector<3x16xf32>
    %c0_5 = arith.constant 0 : index
    %c0_6 = arith.constant 0 : index
    %6 = vector.load %arg7[%c0_5, %c0_6] : memref<3x16xf32, #tpu.memory_space<vmem>>, vector<3x16xf32>
    %cst = arith.constant 0.000000e+00 : f32
    %7 = vector.broadcast %cst : f32 to vector<10x1x16xf32>
    %c0_7 = arith.constant 0 : index
    %c7 = arith.constant 7 : index
    %c0_8 = arith.constant 0 : index
    %8 = vector.load %arg13[%c0_7, %c7, %c0_8] : memref<10x25x16xf32, #tpu.memory_space<vmem>>, vector<10x1x16xf32>
    tpu.vector_store %arg13[%c0_7, %c7, %c0_8], %7 {strides = array<i32>} : memref<10x25x16xf32, #tpu.memory_space<vmem>>, vector<10x1x16xf32>,
    %cst_9 = arith.constant 0.000000e+00 : f32
    %9 = vector.broadcast %cst_9 : f32 to vector<10x1x16xf32>
    %c0_10 = arith.constant 0 : index
    %c24 = arith.constant 24 : index
    %c0_11 = arith.constant 0 : index
    %10 = vector.load %arg13[%c0_10, %c24, %c0_11] : memref<10x25x16xf32, #tpu.memory_space<vmem>>, vector<10x1x16xf32>
    tpu.vector_store %arg13[%c0_10, %c24, %c0_11], %9 {strides = array<i32>} : memref<10x25x16xf32, #tpu.memory_space<vmem>>, vector<10x1x16xf32>,
    %c0_12 = arith.constant 0 : index
    %c0_13 = arith.constant 0 : index
    %11 = arith.index_cast %1 : i32 to index
    %c0_14 = arith.constant 0 : index
    %12 = vector.load %arg2[%c0_12, %c0_13, %11, %c0_14] : memref<1x4x16x16xf32, #tpu.memory_space<vmem>>, vector<1x4x8x16xf32>
    %13 = vector.shape_cast %12 : vector<1x4x8x16xf32> to vector<4x8x16xf32>
    %14 = vector.shape_cast %13 : vector<4x8x16xf32> to vector<4x128xf32>
    %cst_15 = arith.constant dense<0.000000e+00> : vector<128x16xf32>
    %15 = tpu.matmul %14, %3, %cst_15 {dimension_numbers = #tpu.dot_dimension_numbers<[0], [0], [1], [1], [0, 1, 1, 1], [], []>} : vector<4x128xf32>, vector<4x16xf32>, vector<128x16xf32> -> vector<128x16xf32>
    %16 = vector.broadcast %4 : vector<1x16xf32> to vector<128x16xf32>
    %17 = arith.addf %15, %16 : vector<128x16xf32>
    %cst_16 = arith.constant 3.000000e+00 : f32
    %18 = vector.broadcast %cst_16 : f32 to vector<128x16xf32>
    %19 = arith.addf %17, %18 : vector<128x16xf32>
    %cst_17 = arith.constant 0.000000e+00 : f32
    %cst_18 = arith.constant 6.000000e+00 : f32
    %20 = vector.broadcast %cst_17 : f32 to vector<128x16xf32>
    %21 = arith.maximumf %20, %19 : vector<128x16xf32>
    %22 = vector.broadcast %cst_18 : f32 to vector<128x16xf32>
    %23 = arith.minimumf %22, %21 : vector<128x16xf32>
    %24 = arith.mulf %17, %23 : vector<128x16xf32>
    %cst_19 = arith.constant 0.166666672 : f32
    %25 = vector.broadcast %cst_19 : f32 to vector<128x16xf32>
    %26 = arith.mulf %24, %25 : vector<128x16xf32>
    %27 = vector.shape_cast %26 : vector<128x16xf32> to vector<8x16x16xf32>
    %c1 = arith.constant 1 : index
    %c8 = arith.constant 8 : index
    %c0_20 = arith.constant 0 : index
    %28 = vector.load %arg13[%c1, %c8, %c0_20] : memref<10x25x16xf32, #tpu.memory_space<vmem>>, vector<8x16x16xf32>
    tpu.vector_store %arg13[%c1, %c8, %c0_20], %27 {strides = array<i32>} : memref<10x25x16xf32, #tpu.memory_space<vmem>>, vector<8x16x16xf32>,
    %c0_i32 = arith.constant 0 : i32
    %29 = arith.addi %2, %c0_i32 : i32
    %c0_i32_21 = arith.constant 0 : i32
    %c15_i32 = arith.constant 15 : i32
    %30 = arith.maxsi %c0_i32_21, %29 : i32
    %31 = arith.minsi %c15_i32, %30 : i32
    %c0_22 = arith.constant 0 : index
    %c0_23 = arith.constant 0 : index
    %32 = arith.index_cast %31 : i32 to index
    %c0_24 = arith.constant 0 : index
    %33 = vector.load %arg2[%c0_22, %c0_23, %32, %c0_24] : memref<1x4x16x16xf32, #tpu.memory_space<vmem>>, vector<1x4x1x16xf32>
    %34 = vector.shape_cast %33 : vector<1x4x1x16xf32> to vector<4x1x16xf32>
    %35 = vector.shape_cast %34 : vector<4x1x16xf32> to vector<4x16xf32>
    %cst_25 = arith.constant dense<0.000000e+00> : vector<16x16xf32>
    %36 = tpu.matmul %35, %3, %cst_25 {dimension_numbers = #tpu.dot_dimension_numbers<[0], [0], [1], [1], [0, 1, 1, 1], [], []>} : vector<4x16xf32>, vector<4x16xf32>, vector<16x16xf32> -> vector<16x16xf32>
    %37 = vector.broadcast %4 : vector<1x16xf32> to vector<16x16xf32>
    %38 = arith.addf %36, %37 : vector<16x16xf32>
    %cst_26 = arith.constant 3.000000e+00 : f32
    %39 = vector.broadcast %cst_26 : f32 to vector<16x16xf32>
    %40 = arith.addf %38, %39 : vector<16x16xf32>
    %cst_27 = arith.constant 0.000000e+00 : f32
    %cst_28 = arith.constant 6.000000e+00 : f32
    %41 = vector.broadcast %cst_27 : f32 to vector<16x16xf32>
    %42 = arith.maximumf %41, %40 : vector<16x16xf32>
    %43 = vector.broadcast %cst_28 : f32 to vector<16x16xf32>
    %44 = arith.minimumf %43, %42 : vector<16x16xf32>
    %45 = arith.mulf %38, %44 : vector<16x16xf32>
    %cst_29 = arith.constant 0.166666672 : f32
    %46 = vector.broadcast %cst_29 : f32 to vector<16x16xf32>
    %47 = arith.mulf %45, %46 : vector<16x16xf32>
    %c0_i32_30 = arith.constant 0 : i32
    %48 = arith.cmpi sge, %29, %c0_i32_30 : i32
    %c16_i32 = arith.constant 16 : i32
    %49 = arith.cmpi slt, %29, %c16_i32 : i32
    %50 = arith.andi %48, %49 : i1
    %cst_31 = arith.constant 0.000000e+00 : f32
    %51 = vector.broadcast %cst_31 : f32 to vector<16x16xf32>
    %52 = arith.select %50, %47, %51 : vector<16x16xf32>
    %c0_32 = arith.constant 0 : index
    %c8_33 = arith.constant 8 : index
    %c0_34 = arith.constant 0 : index
    %53 = vector.load %arg13[%c0_32, %c8_33, %c0_34] : memref<10x25x16xf32, #tpu.memory_space<vmem>>, vector<1x16x16xf32>
    %54 = vector.shape_cast %53 : vector<1x16x16xf32> to vector<16x16xf32>
    %55 = vector.shape_cast %52 : vector<16x16xf32> to vector<1x16x16xf32>
    tpu.vector_store %arg13[%c0_32, %c8_33, %c0_34], %55 {strides = array<i32>} : memref<10x25x16xf32, #tpu.memory_space<vmem>>, vector<1x16x16xf32>,
    %c9_i32 = arith.constant 9 : i32
    %56 = arith.addi %2, %c9_i32 : i32
    %c0_i32_35 = arith.constant 0 : i32
    %c15_i32_36 = arith.constant 15 : i32
    %57 = arith.maxsi %c0_i32_35, %56 : i32
    %58 = arith.minsi %c15_i32_36, %57 : i32
    %c0_37 = arith.constant 0 : index
    %c0_38 = arith.constant 0 : index
    %59 = arith.index_cast %58 : i32 to index
    %c0_39 = arith.constant 0 : index
    %60 = vector.load %arg2[%c0_37, %c0_38, %59, %c0_39] : memref<1x4x16x16xf32, #tpu.memory_space<vmem>>, vector<1x4x1x16xf32>
    %61 = vector.shape_cast %60 : vector<1x4x1x16xf32> to vector<4x1x16xf32>
    %62 = vector.shape_cast %61 : vector<4x1x16xf32> to vector<4x16xf32>
    %cst_40 = arith.constant dense<0.000000e+00> : vector<16x16xf32>
    %63 = tpu.matmul %62, %3, %cst_40 {dimension_numbers = #tpu.dot_dimension_numbers<[0], [0], [1], [1], [0, 1, 1, 1], [], []>} : vector<4x16xf32>, vector<4x16xf32>, vector<16x16xf32> -> vector<16x16xf32>
    %64 = vector.broadcast %4 : vector<1x16xf32> to vector<16x16xf32>
    %65 = arith.addf %63, %64 : vector<16x16xf32>
    %cst_41 = arith.constant 3.000000e+00 : f32
    %66 = vector.broadcast %cst_41 : f32 to vector<16x16xf32>
    %67 = arith.addf %65, %66 : vector<16x16xf32>
    %cst_42 = arith.constant 0.000000e+00 : f32
    %cst_43 = arith.constant 6.000000e+00 : f32
    %68 = vector.broadcast %cst_42 : f32 to vector<16x16xf32>
    %69 = arith.maximumf %68, %67 : vector<16x16xf32>
    %70 = vector.broadcast %cst_43 : f32 to vector<16x16xf32>
    %71 = arith.minimumf %70, %69 : vector<16x16xf32>
    %72 = arith.mulf %65, %71 : vector<16x16xf32>
    %cst_44 = arith.constant 0.166666672 : f32
    %73 = vector.broadcast %cst_44 : f32 to vector<16x16xf32>
    %74 = arith.mulf %72, %73 : vector<16x16xf32>
    %c0_i32_45 = arith.constant 0 : i32
    %75 = arith.cmpi sge, %56, %c0_i32_45 : i32
    %c16_i32_46 = arith.constant 16 : i32
    %76 = arith.cmpi slt, %56, %c16_i32_46 : i32
    %77 = arith.andi %75, %76 : i1
    %cst_47 = arith.constant 0.000000e+00 : f32
    %78 = vector.broadcast %cst_47 : f32 to vector<16x16xf32>
    %79 = arith.select %77, %74, %78 : vector<16x16xf32>
    %c9 = arith.constant 9 : index
    %c8_48 = arith.constant 8 : index
    %c0_49 = arith.constant 0 : index
    %80 = vector.load %arg13[%c9, %c8_48, %c0_49] : memref<10x25x16xf32, #tpu.memory_space<vmem>>, vector<1x16x16xf32>
    %81 = vector.shape_cast %80 : vector<1x16x16xf32> to vector<16x16xf32>
    %82 = vector.shape_cast %79 : vector<16x16xf32> to vector<1x16x16xf32>
    tpu.vector_store %arg13[%c9, %c8_48, %c0_49], %82 {strides = array<i32>} : memref<10x25x16xf32, #tpu.memory_space<vmem>>, vector<1x16x16xf32>,
    %cst_50 = arith.constant 0.000000e+00 : f32
    %83 = vector.broadcast %cst_50 : f32 to vector<8x16x16xf32>
    %cst_51 = arith.constant 0.000000e+00 : f32
    %84 = vector.broadcast %cst_51 : f32 to vector<8x16x16xf32>
    %c1_52 = arith.constant 1 : index
    %c7_53 = arith.constant 7 : index
    %c0_54 = arith.constant 0 : index
    %85 = vector.load %arg13[%c1_52, %c7_53, %c0_54] : memref<10x25x16xf32, #tpu.memory_space<vmem>>, vector<8x16x16xf32>
    %86 = vector.extract_strided_slice %5 {offsets = [0, 0], sizes = [1, 16], strides = [1, 1]} : vector<3x16xf32> to vector<1x16xf32>
    %87 = vector.shape_cast %86 : vector<1x16xf32> to vector<16xf32>
    %88 = vector.shape_cast %87 : vector<16xf32> to vector<1x1x16xf32>
    %89 = vector.broadcast %88 : vector<1x1x16xf32> to vector<8x16x16xf32>
    %90 = arith.mulf %85, %89 : vector<8x16x16xf32>
    %91 = arith.addf %83, %90 : vector<8x16x16xf32>
    %c0_55 = arith.constant 0 : index
    %c8_56 = arith.constant 8 : index
    %c0_57 = arith.constant 0 : index
    %92 = vector.load %arg13[%c0_55, %c8_56, %c0_57] : memref<10x25x16xf32, #tpu.memory_space<vmem>>, vector<8x16x16xf32>
    %93 = vector.extract_strided_slice %6 {offsets = [0, 0], sizes = [1, 16], strides = [1, 1]} : vector<3x16xf32> to vector<1x16xf32>
    %94 = vector.shape_cast %93 : vector<1x16xf32> to vector<16xf32>
    %95 = vector.shape_cast %94 : vector<16xf32> to vector<1x1x16xf32>
    %96 = vector.broadcast %95 : vector<1x1x16xf32> to vector<8x16x16xf32>
    %97 = arith.mulf %92, %96 : vector<8x16x16xf32>
    %98 = arith.addf %84, %97 : vector<8x16x16xf32>
    %c1_58 = arith.constant 1 : index
    %c8_59 = arith.constant 8 : index
    %c0_60 = arith.constant 0 : index
    %99 = vector.load %arg13[%c1_58, %c8_59, %c0_60] : memref<10x25x16xf32, #tpu.memory_space<vmem>>, vector<8x16x16xf32>
    %100 = vector.extract_strided_slice %5 {offsets = [1, 0], sizes = [1, 16], strides = [1, 1]} : vector<3x16xf32> to vector<1x16xf32>
    %101 = vector.shape_cast %100 : vector<1x16xf32> to vector<16xf32>
    %102 = vector.shape_cast %101 : vector<16xf32> to vector<1x1x16xf32>
    %103 = vector.broadcast %102 : vector<1x1x16xf32> to vector<8x16x16xf32>
    %104 = arith.mulf %99, %103 : vector<8x16x16xf32>
    %105 = arith.addf %91, %104 : vector<8x16x16xf32>
    %c1_61 = arith.constant 1 : index
    %c8_62 = arith.constant 8 : index
    %c0_63 = arith.constant 0 : index
    %106 = vector.load %arg13[%c1_61, %c8_62, %c0_63] : memref<10x25x16xf32, #tpu.memory_space<vmem>>, vector<8x16x16xf32>
    %107 = vector.extract_strided_slice %6 {offsets = [1, 0], sizes = [1, 16], strides = [1, 1]} : vector<3x16xf32> to vector<1x16xf32>
    %108 = vector.shape_cast %107 : vector<1x16xf32> to vector<16xf32>
    %109 = vector.shape_cast %108 : vector<16xf32> to vector<1x1x16xf32>
    %110 = vector.broadcast %109 : vector<1x1x16xf32> to vector<8x16x16xf32>
    %111 = arith.mulf %106, %110 : vector<8x16x16xf32>
    %112 = arith.addf %98, %111 : vector<8x16x16xf32>
    %c1_64 = arith.constant 1 : index
    %c9_65 = arith.constant 9 : index
    %c0_66 = arith.constant 0 : index
    %113 = vector.load %arg13[%c1_64, %c9_65, %c0_66] : memref<10x25x16xf32, #tpu.memory_space<vmem>>, vector<8x16x16xf32>
    %114 = vector.extract_strided_slice %5 {offsets = [2, 0], sizes = [1, 16], strides = [1, 1]} : vector<3x16xf32> to vector<1x16xf32>
    %115 = vector.shape_cast %114 : vector<1x16xf32> to vector<16xf32>
    %116 = vector.shape_cast %115 : vector<16xf32> to vector<1x1x16xf32>
    %117 = vector.broadcast %116 : vector<1x1x16xf32> to vector<8x16x16xf32>
    %118 = arith.mulf %113, %117 : vector<8x16x16xf32>
    %119 = arith.addf %105, %118 : vector<8x16x16xf32>
    %c2 = arith.constant 2 : index
    %c8_67 = arith.constant 8 : index
    %c0_68 = arith.constant 0 : index
    %120 = vector.load %arg13[%c2, %c8_67, %c0_68] : memref<10x25x16xf32, #tpu.memory_space<vmem>>, vector<8x16x16xf32>
    %121 = vector.extract_strided_slice %6 {offsets = [2, 0], sizes = [1, 16], strides = [1, 1]} : vector<3x16xf32> to vector<1x16xf32>
    %122 = vector.shape_cast %121 : vector<1x16xf32> to vector<16xf32>
    %123 = vector.shape_cast %122 : vector<16xf32> to vector<1x1x16xf32>
    %124 = vector.broadcast %123 : vector<1x1x16xf32> to vector<8x16x16xf32>
    %125 = arith.mulf %120, %124 : vector<8x16x16xf32>
    %126 = arith.addf %112, %125 : vector<8x16x16xf32>
    %c0_69 = arith.constant 0 : index
    %c0_70 = arith.constant 0 : index
    %127 = vector.load %arg6[%c0_69, %c0_70] : memref<1x16xf32, #tpu.memory_space<vmem>>, vector<1x16xf32>
    %128 = vector.shape_cast %127 : vector<1x16xf32> to vector<1x1x16xf32>
    %129 = vector.broadcast %128 : vector<1x1x16xf32> to vector<8x16x16xf32>
    %130 = arith.addf %119, %129 : vector<8x16x16xf32>
    %c0_71 = arith.constant 0 : index
    %c0_72 = arith.constant 0 : index
    %131 = vector.load %arg8[%c0_71, %c0_72] : memref<1x16xf32, #tpu.memory_space<vmem>>, vector<1x16xf32>
    %132 = vector.shape_cast %131 : vector<1x16xf32> to vector<1x1x16xf32>
    %133 = vector.broadcast %132 : vector<1x1x16xf32> to vector<8x16x16xf32>
    %134 = arith.addf %126, %133 : vector<8x16x16xf32>
    %c0_73 = arith.constant 0 : index
    %c0_74 = arith.constant 0 : index
    %c0_75 = arith.constant 0 : index
    %c0_76 = arith.constant 0 : index
    %135 = vector.load %arg9[%c0_73, %c0_74, %c0_75, %c0_76] : memref<1x8x16x16xf32, #tpu.memory_space<vmem>>, vector<1x8x16x16xf32>
    %136 = vector.shape_cast %135 : vector<1x8x16x16xf32> to vector<8x16x16xf32>
    %137 = vector.shape_cast %130 : vector<8x16x16xf32> to vector<1x8x16x16xf32>
    tpu.vector_store %arg9[%c0_73, %c0_74, %c0_75, %c0_76], %137 {strides = array<i32>} : memref<1x8x16x16xf32, #tpu.memory_space<vmem>>, vector<1x8x16x16xf32>,
    %c0_77 = arith.constant 0 : index
    %c0_78 = arith.constant 0 : index
    %c0_79 = arith.constant 0 : index
    %c0_80 = arith.constant 0 : index
    %138 = vector.load %arg10[%c0_77, %c0_78, %c0_79, %c0_80] : memref<1x8x16x16xf32, #tpu.memory_space<vmem>>, vector<1x8x16x16xf32>
    %139 = vector.shape_cast %138 : vector<1x8x16x16xf32> to vector<8x16x16xf32>
    %140 = vector.shape_cast %134 : vector<8x16x16xf32> to vector<1x8x16x16xf32>
    tpu.vector_store %arg10[%c0_77, %c0_78, %c0_79, %c0_80], %140 {strides = array<i32>} : memref<1x8x16x16xf32, #tpu.memory_space<vmem>>, vector<1x8x16x16xf32>,
    %cst_81 = arith.constant dense<0.000000e+00> : vector<16xf32>
    %141 = vector.multi_reduction <add>, %130, %cst_81 [0, 1] : vector<8x16x16xf32> to vector<16xf32>
    %142 = vector.shape_cast %141 : vector<16xf32> to vector<1x16xf32>
    %143 = vector.shape_cast %142 : vector<1x16xf32> to vector<1x16xf32>
    %144 = vector.broadcast %143 : vector<1x16xf32> to vector<8x16xf32>
    %c0_82 = arith.constant 0 : index
    %c0_83 = arith.constant 0 : index
    %c0_84 = arith.constant 0 : index
    %c0_85 = arith.constant 0 : index
    %145 = vector.load %arg11[%c0_82, %c0_83, %c0_84, %c0_85] : memref<1x1x8x16xf32, #tpu.memory_space<vmem>>, vector<1x1x8x16xf32>
    %146 = vector.shape_cast %145 : vector<1x1x8x16xf32> to vector<8x16xf32>
    %147 = vector.shape_cast %144 : vector<8x16xf32> to vector<1x1x8x16xf32>
    tpu.vector_store %arg11[%c0_82, %c0_83, %c0_84, %c0_85], %147 {strides = array<i32>} : memref<1x1x8x16xf32, #tpu.memory_space<vmem>>, vector<1x1x8x16xf32>,
    %cst_86 = arith.constant dense<0.000000e+00> : vector<16xf32>
    %148 = vector.multi_reduction <add>, %134, %cst_86 [0, 1] : vector<8x16x16xf32> to vector<16xf32>
    %149 = vector.shape_cast %148 : vector<16xf32> to vector<1x16xf32>
    %150 = vector.shape_cast %149 : vector<1x16xf32> to vector<1x16xf32>
    %151 = vector.broadcast %150 : vector<1x16xf32> to vector<8x16xf32>
    %c0_87 = arith.constant 0 : index
    %c0_88 = arith.constant 0 : index
    %c0_89 = arith.constant 0 : index
    %c0_90 = arith.constant 0 : index
    %152 = vector.load %arg12[%c0_87, %c0_88, %c0_89, %c0_90] : memref<1x1x8x16xf32, #tpu.memory_space<vmem>>, vector<1x1x8x16xf32>
    %153 = vector.shape_cast %152 : vector<1x1x8x16xf32> to vector<8x16xf32>
    %154 = vector.shape_cast %151 : vector<8x16xf32> to vector<1x1x8x16xf32>
    tpu.vector_store %arg12[%c0_87, %c0_88, %c0_89, %c0_90], %154 {strides = array<i32>} : memref<1x1x8x16xf32, #tpu.memory_space<vmem>>, vector<1x1x8x16xf32>,
    return
  }
  func.func @transform_0(%arg0: i32, %arg1: i32) -> (i32, i32, i32, i32) {
    %c0_i32 = arith.constant 0 : i32
    %c0_i32_0 = arith.constant 0 : i32
    %c0_i32_1 = arith.constant 0 : i32
    %c0_i32_2 = arith.constant 0 : i32
    return %arg0, %c0_i32, %c0_i32_0, %c0_i32_1 : i32, i32, i32, i32
  }
  func.func @transform_1(%arg0: i32, %arg1: i32) -> (i32, i32) {
    %c0_i32 = arith.constant 0 : i32
    %c0_i32_0 = arith.constant 0 : i32
    %c0_i32_1 = arith.constant 0 : i32
    return %c0_i32, %c0_i32_0 : i32, i32
  }
  func.func @transform_2(%arg0: i32, %arg1: i32) -> (i32, i32) {
    %c0_i32 = arith.constant 0 : i32
    %c0_i32_0 = arith.constant 0 : i32
    %c0_i32_1 = arith.constant 0 : i32
    return %c0_i32, %c0_i32_0 : i32, i32
  }
  func.func @transform_3(%arg0: i32, %arg1: i32) -> (i32, i32) {
    %c0_i32 = arith.constant 0 : i32
    %c0_i32_0 = arith.constant 0 : i32
    %c0_i32_1 = arith.constant 0 : i32
    return %c0_i32, %c0_i32_0 : i32, i32
  }
  func.func @transform_4(%arg0: i32, %arg1: i32) -> (i32, i32) {
    %c0_i32 = arith.constant 0 : i32
    %c0_i32_0 = arith.constant 0 : i32
    %c0_i32_1 = arith.constant 0 : i32
    return %c0_i32, %c0_i32_0 : i32, i32
  }
  func.func @transform_5(%arg0: i32, %arg1: i32) -> (i32, i32) {
    %c0_i32 = arith.constant 0 : i32
    %c0_i32_0 = arith.constant 0 : i32
    %c0_i32_1 = arith.constant 0 : i32
    return %c0_i32, %c0_i32_0 : i32, i32
  }
  func.func @transform_6(%arg0: i32, %arg1: i32) -> (i32, i32) {
    %c0_i32 = arith.constant 0 : i32
    %c0_i32_0 = arith.constant 0 : i32
    %c0_i32_1 = arith.constant 0 : i32
    return %c0_i32, %c0_i32_0 : i32, i32
  }
  func.func @transform_7(%arg0: i32, %arg1: i32) -> (i32, i32, i32, i32) {
    %c0_i32 = arith.constant 0 : i32
    %c0_i32_0 = arith.constant 0 : i32
    %c0_i32_1 = arith.constant 0 : i32
    return %arg0, %arg1, %c0_i32, %c0_i32_0 : i32, i32, i32, i32
  }
  func.func @transform_8(%arg0: i32, %arg1: i32) -> (i32, i32, i32, i32) {
    %c0_i32 = arith.constant 0 : i32
    %c0_i32_0 = arith.constant 0 : i32
    %c0_i32_1 = arith.constant 0 : i32
    return %arg0, %arg1, %c0_i32, %c0_i32_0 : i32, i32, i32, i32
  }
  func.func @transform_9(%arg0: i32, %arg1: i32) -> (i32, i32, i32, i32) {
    %c0_i32 = arith.constant 0 : i32
    %c0_i32_0 = arith.constant 0 : i32
    %c0_i32_1 = arith.constant 0 : i32
    return %arg0, %arg1, %c0_i32, %c0_i32_0 : i32, i32, i32, i32
  }
  func.func @transform_10(%arg0: i32, %arg1: i32) -> (i32, i32, i32, i32) {
    %c0_i32 = arith.constant 0 : i32
    %c0_i32_0 = arith.constant 0 : i32
    %c0_i32_1 = arith.constant 0 : i32
    return %arg0, %arg1, %c0_i32, %c0_i32_0 : i32, i32, i32, i32
  }
}

</mosaic_0001>

<llo_original>
// kernel: tpu_custom_call.1
$region0: #{tpu_custom_call.1}
  #allocation0 [shape = 'u32[]', space=smem, size = 0x4, offset = 0x4, fixed_abs, tag = 'smem constant byte address 0x4 - core index']
  #allocation1 [shape = 'u32[144,128]{1,0:T(1,128)}', space=vmem, size = 0x12000, scoped, tag = 'internal scratch']
  #allocation2 [shape = 'f32[10,25,16]{2,1,0:T(8,128)}', space=vmem, size = 0x28000, scoped, tag = 'scratch operand']
  %s0 = inlined_call_operand.hbm [shape: f32[2,4,16,16], index: 0, kind: input, shape index: {}]
  %s1 = inlined_call_operand.hbm [shape: f32[4,16], index: 1, kind: input, shape index: {}]
  %s2 = inlined_call_operand.vmem [shape: f32[1,16], index: 2, kind: input, shape index: {}]
  %s3 = inlined_call_operand.vmem [shape: f32[3,16], index: 3, kind: input, shape index: {}]
  %s4 = inlined_call_operand.vmem [shape: f32[1,16], index: 4, kind: input, shape index: {}]
  %s5 = inlined_call_operand.vmem [shape: f32[3,16], index: 5, kind: input, shape index: {}]
  %s6 = inlined_call_operand.vmem [shape: f32[1,16], index: 6, kind: input, shape index: {}]
  %s7 = inlined_call_operand.hbm [shape: f32[2,16,16,16], index: 7, kind: output, shape index: {0}]
  %s8 = inlined_call_operand.hbm [shape: f32[2,16,16,16], index: 8, kind: output, shape index: {1}]
  %s9 = inlined_call_operand.hbm [shape: f32[2,2,8,16], index: 9, kind: output, shape index: {2}]
  %s10 = inlined_call_operand.hbm [shape: f32[2,2,8,16], index: 10, kind: output, shape index: {3}]
  %11 = xla_tuple %s7, %s8, %s9, %s10
  %s12 = sld [smem:[#allocation0]]
  $region93: #{tpu_custom_call.1} parent=0
    _
  %s14 = ssub.s32 1, %s12
  %s15 = scalar_select 0, %s14, %s12
  $region1: #{tpu_custom_call.1} parent=0
    #allocation3 [shape = 'u8[65536]{0}', space=vmem, size = 0x10000, scoped, tag = 'input window, operand 0']
    #allocation4 [shape = 's32[2]{0}', space=sflag, size = 0x8, scoped, tag = 'scoped memory for tpu_custom_call.1']
    #allocation5 [shape = 's32[2]{0}', space=sflag, size = 0x8, scoped, tag = 'scoped memory for tpu_custom_call.1']
    #allocation6 [shape = 'u8[2048]{0}', space=vmem, size = 0x800, scoped, tag = 'input window, operand 1, single buffered']
    #allocation7 [shape = 's32[1]{0}', space=sflag, size = 0x4, scoped, tag = 'scoped memory for tpu_custom_call.1']
    #allocation8 [shape = 'u8[131072]{0}', space=vmem, size = 0x20000, scoped, tag = 'output window, operand 0']
    #allocation9 [shape = 'u8[131072]{0}', space=vmem, size = 0x20000, scoped, tag = 'output window, operand 1']
    #allocation10 [shape = 's32[2]{0}', space=sflag, size = 0x8, scoped, tag = 'scoped memory for tpu_custom_call.1']
    #allocation11 [shape = 'u8[8192]{0}', space=vmem, size = 0x2000, scoped, tag = 'output window, operand 2']
    #allocation12 [shape = 'u8[8192]{0}', space=vmem, size = 0x2000, scoped, tag = 'output window, operand 3']
    #allocation13 [shape = 's32[2]{0}', space=sflag, size = 0x8, scoped, tag = 'scoped memory for tpu_custom_call.1']
    %16 = vsyncpa [#allocation4], 0
    %s17 = scalar_lea.sflag [#allocation4], 1
    %18 = vsyncpa %s17, 0
    %19 = vsyncpa [#allocation7], 0
    %20 = vsyncpa [#allocation5], 0
    %s21 = scalar_lea.sflag [#allocation5], 1
    %22 = vsyncpa %s21, 0
    %23 = vsyncpa [#allocation10], 0
    %s24 = scalar_lea.sflag [#allocation10], 1
    %25 = vsyncpa %s24, 0
    %26 = vsyncpa [#allocation13], 0
    %s27 = scalar_lea.sflag [#allocation13], 1
    %28 = vsyncpa %s27, 0
    loop: start=0, step=1, limit=6
    $region2: #{tpu_custom_call.1} parent=1 // loop_pre_header
      _
    $region3: #{tpu_custom_call.1} parent=1 // loop_header
      %s30 = sphi 0, %s34
      %p31 = scmp.ge.s32.totalorder %s30, 6
      %s37 = sphi 0, %s49
      %s38 = sphi 0, %s45
      %s39 = sphi 0, %s37
      %s40 = sphi 0, %s38
      %s41 = sphi 0, %s39
      %s42 = sphi 0, %s40
      %s52 = sphi 0, %s54
      %s55 = sphi 0, %s52
      %s56 = sphi 0, %s55
      %s72 = sphi 0, %s56
      %s76 = sphi 0, %s76
      %s78 = sphi 0, %s76
      %s79 = sphi 0, %s78
      %s93 = sphi 0, %s79
      %s97 = sphi 0, %s97
      %s99 = sphi 0, %s97
      %s100 = sphi 0, %s99
      %s114 = sphi 0, %s100
      %s118 = sphi 0, %s118
      %s120 = sphi 0, %s118
      %s121 = sphi 0, %s120
      %s135 = sphi 0, %s121
      %s139 = sphi 0, %s139
      %s141 = sphi 0, %s139
      %s142 = sphi 0, %s141
      %s156 = sphi 0, %s142
      %s160 = sphi 0, %s160
      %s162 = sphi 0, %s160
      %s163 = sphi 0, %s162
      %s177 = sphi 0, %s163
      %s181 = sphi 0, %s181
      %s183 = sphi 0, %s181
      %s184 = sphi 0, %s183
      %s198 = sphi 0, %s184
      %s206 = sphi 0, %s208
      %s209 = sphi 0, %s206
      %s210 = sphi 0, %s209
      %s226 = sphi 0, %s210
      %s234 = sphi 0, %s236
      %s237 = sphi 0, %s234
      %s238 = sphi 0, %s237
      %s254 = sphi 0, %s238
      %s262 = sphi 0, %s264
      %s265 = sphi 0, %s262
      %s266 = sphi 0, %s265
      %s282 = sphi 0, %s266
      %s290 = sphi 0, %s292
      %s293 = sphi 0, %s290
      %s294 = sphi 0, %s293
      %s310 = sphi 0, %s294
    $region4: #{tpu_custom_call.1} parent=1 // loop_header_branch
      %33 = sbr.rel (%p31) target = $region8
    $region5: #{tpu_custom_call.1} parent=1 // loop_body
      %s35 = ssub.s32 %s30, 1
      %s36 = ssub.s32 %s30, 2
      %s43 = sadd.s32 1, %s38
      %p44 = scmp.ge.s32.totalorder %s43, 2
      %s45 = scalar_select %p44, 0, %s43
      %s46 = sadd.s32 1, %s37
      %s47 = scalar_select %p44, %s46, %s37
      %p48 = scmp.ge.s32.totalorder %s47, 2
      %s49 = scalar_select %p48, 0, %s47
      %s50 = ssub.s32 %s37, %s49
      %p51 = scmp.eq.s32.totalorder %s50, 0
      %s53 = sadd.s32 %s52, 1
      %s54 = scalar_select %p51, %s52, %s53
      %p57 = pneg %p51
      %p58 = scmp.eq.s32.totalorder %s30, 3
      %p59 = por %p57, %p58
      %p60 = scmp.ne.s32.totalorder %s52, %s55
      %p61 = scmp.eq.s32.totalorder %s30, 0
      %p62 = por %p60, %p61
      %p63 = scmp.ne.s32.totalorder %s52, %s55
      %p64 = scmp.eq.s32.totalorder %s35, 3
      %p65 = por %p63, %p64
      %p66 = scmp.ne.s32.totalorder %s55, %s56
      %p67 = scmp.eq.s32.totalorder %s35, 0
      %p68 = por %p66, %p67
      %p69 = scmp.ne.s32.totalorder %s55, %s56
      %p70 = scmp.eq.s32.totalorder %s36, 3
      %p71 = por %p69, %p70
      %p73 = scmp.ne.s32.totalorder %s56, %s72
      %p74 = scmp.eq.s32.totalorder %s36, 0
      %p75 = por %p73, %p74
      %s77 = sadd.s32 %s76, 1
      %p80 = scmp.eq.s32.totalorder %s30, 3
      %p81 = scmp.ne.s32.totalorder %s76, %s78
      %p82 = scmp.eq.s32.totalorder %s30, 0
      %p83 = por %p81, %p82
      %p84 = scmp.ne.s32.totalorder %s76, %s78
      %p85 = scmp.eq.s32.totalorder %s35, 3
      %p86 = por %p84, %p85
      %p87 = scmp.ne.s32.totalorder %s78, %s79
      %p88 = scmp.eq.s32.totalorder %s35, 0
      %p89 = por %p87, %p88
      %p90 = scmp.ne.s32.totalorder %s78, %s79
      %p91 = scmp.eq.s32.totalorder %s36, 3
      %p92 = por %p90, %p91
      %p94 = scmp.ne.s32.totalorder %s79, %s93
      %p95 = scmp.eq.s32.totalorder %s36, 0
      %p96 = por %p94, %p95
      %s98 = sadd.s32 %s97, 1
      %p101 = scmp.eq.s32.totalorder %s30, 3
      %p102 = scmp.ne.s32.totalorder %s97, %s99
      %p103 = scmp.eq.s32.totalorder %s30, 0
      %p104 = por %p102, %p103
      %p105 = scmp.ne.s32.totalorder %s97, %s99
      %p106 = scmp.eq.s32.totalorder %s35, 3
      %p107 = por %p105, %p106
      %p108 = scmp.ne.s32.totalorder %s99, %s100
      %p109 = scmp.eq.s32.totalorder %s35, 0
      %p110 = por %p108, %p109
      %p111 = scmp.ne.s32.totalorder %s99, %s100
      %p112 = scmp.eq.s32.totalorder %s36, 3
      %p113 = por %p111, %p112
      %p115 = scmp.ne.s32.totalorder %s100, %s114
      %p116 = scmp.eq.s32.totalorder %s36, 0
      %p117 = por %p115, %p116
      %s119 = sadd.s32 %s118, 1
      %p122 = scmp.eq.s32.totalorder %s30, 3
      %p123 = scmp.ne.s32.totalorder %s118, %s120
      %p124 = scmp.eq.s32.totalorder %s30, 0
      %p125 = por %p123, %p124
      %p126 = scmp.ne.s32.totalorder %s118, %s120
      %p127 = scmp.eq.s32.totalorder %s35, 3
      %p128 = por %p126, %p127
      %p129 = scmp.ne.s32.totalorder %s120, %s121
      %p130 = scmp.eq.s32.totalorder %s35, 0
      %p131 = por %p129, %p130
      %p132 = scmp.ne.s32.totalorder %s120, %s121
      %p133 = scmp.eq.s32.totalorder %s36, 3
      %p134 = por %p132, %p133
      %p136 = scmp.ne.s32.totalorder %s121, %s135
      %p137 = scmp.eq.s32.totalorder %s36, 0
      %p138 = por %p136, %p137
      %s140 = sadd.s32 %s139, 1
      %p143 = scmp.eq.s32.totalorder %s30, 3
      %p144 = scmp.ne.s32.totalorder %s139, %s141
      %p145 = scmp.eq.s32.totalorder %s30, 0
      %p146 = por %p144, %p145
      %p147 = scmp.ne.s32.totalorder %s139, %s141
      %p148 = scmp.eq.s32.totalorder %s35, 3
      %p149 = por %p147, %p148
      %p150 = scmp.ne.s32.totalorder %s141, %s142
      %p151 = scmp.eq.s32.totalorder %s35, 0
      %p152 = por %p150, %p151
      %p153 = scmp.ne.s32.totalorder %s141, %s142
      %p154 = scmp.eq.s32.totalorder %s36, 3
      %p155 = por %p153, %p154
      %p157 = scmp.ne.s32.totalorder %s142, %s156
      %p158 = scmp.eq.s32.totalorder %s36, 0
      %p159 = por %p157, %p158
      %s161 = sadd.s32 %s160, 1
      %p164 = scmp.eq.s32.totalorder %s30, 3
      %p165 = scmp.ne.s32.totalorder %s160, %s162
      %p166 = scmp.eq.s32.totalorder %s30, 0
      %p167 = por %p165, %p166
      %p168 = scmp.ne.s32.totalorder %s160, %s162
      %p169 = scmp.eq.s32.totalorder %s35, 3
      %p170 = por %p168, %p169
      %p171 = scmp.ne.s32.totalorder %s162, %s163
      %p172 = scmp.eq.s32.totalorder %s35, 0
      %p173 = por %p171, %p172
      %p174 = scmp.ne.s32.totalorder %s162, %s163
      %p175 = scmp.eq.s32.totalorder %s36, 3
      %p176 = por %p174, %p175
      %p178 = scmp.ne.s32.totalorder %s163, %s177
      %p179 = scmp.eq.s32.totalorder %s36, 0
      %p180 = por %p178, %p179
      %s182 = sadd.s32 %s181, 1
      %p185 = scmp.eq.s32.totalorder %s30, 3
      %p186 = scmp.ne.s32.totalorder %s181, %s183
      %p187 = scmp.eq.s32.totalorder %s30, 0
      %p188 = por %p186, %p187
      %p189 = scmp.ne.s32.totalorder %s181, %s183
      %p190 = scmp.eq.s32.totalorder %s35, 3
      %p191 = por %p189, %p190
      %p192 = scmp.ne.s32.totalorder %s183, %s184
      %p193 = scmp.eq.s32.totalorder %s35, 0
      %p194 = por %p192, %p193
      %p195 = scmp.ne.s32.totalorder %s183, %s184
      %p196 = scmp.eq.s32.totalorder %s36, 3
      %p197 = por %p195, %p196
      %p199 = scmp.ne.s32.totalorder %s184, %s198
      %p200 = scmp.eq.s32.totalorder %s36, 0
      %p201 = por %p199, %p200
      %s202 = ssub.s32 %s37, %s49
      %s203 = ssub.s32 %s38, %s45
      %s204 = sor.u32 %s202, %s203
      %p205 = scmp.eq.s32.totalorder %s204, 0
      %s207 = sadd.s32 %s206, 1
      %s208 = scalar_select %p205, %s206, %s207
      %p211 = pneg %p205
      %p212 = scmp.eq.s32.totalorder %s30, 3
      %p213 = por %p211, %p212
      %p214 = scmp.ne.s32.totalorder %s206, %s209
      %p215 = scmp.eq.s32.totalorder %s30, 0
      %p216 = por %p214, %p215
      %p217 = scmp.ne.s32.totalorder %s206, %s209
      %p218 = scmp.eq.s32.totalorder %s35, 3
      %p219 = por %p217, %p218
      %p220 = scmp.ne.s32.totalorder %s209, %s210
      %p221 = scmp.eq.s32.totalorder %s35, 0
      %p222 = por %p220, %p221
      %p223 = scmp.ne.s32.totalorder %s209, %s210
      %p224 = scmp.eq.s32.totalorder %s36, 3
      %p225 = por %p223, %p224
      %p227 = scmp.ne.s32.totalorder %s210, %s226
      %p228 = scmp.eq.s32.totalorder %s36, 0
      %p229 = por %p227, %p228
      %s230 = ssub.s32 %s37, %s49
      %s231 = ssub.s32 %s38, %s45
      %s232 = sor.u32 %s230, %s231
      %p233 = scmp.eq.s32.totalorder %s232, 0
      %s235 = sadd.s32 %s234, 1
      %s236 = scalar_select %p233, %s234, %s235
      %p239 = pneg %p233
      %p240 = scmp.eq.s32.totalorder %s30, 3
      %p241 = por %p239, %p240
      %p242 = scmp.ne.s32.totalorder %s234, %s237
      %p243 = scmp.eq.s32.totalorder %s30, 0
      %p244 = por %p242, %p243
      %p245 = scmp.ne.s32.totalorder %s234, %s237
      %p246 = scmp.eq.s32.totalorder %s35, 3
      %p247 = por %p245, %p246
      %p248 = scmp.ne.s32.totalorder %s237, %s238
      %p249 = scmp.eq.s32.totalorder %s35, 0
      %p250 = por %p248, %p249
      %p251 = scmp.ne.s32.totalorder %s237, %s238
      %p252 = scmp.eq.s32.totalorder %s36, 3
      %p253 = por %p251, %p252
      %p255 = scmp.ne.s32.totalorder %s238, %s254
      %p256 = scmp.eq.s32.totalorder %s36, 0
      %p257 = por %p255, %p256
      %s258 = ssub.s32 %s37, %s49
      %s259 = ssub.s32 %s38, %s45
      %s260 = sor.u32 %s258, %s259
      %p261 = scmp.eq.s32.totalorder %s260, 0
      %s263 = sadd.s32 %s262, 1
      %s264 = scalar_select %p261, %s262, %s263
      %p267 = pneg %p261
      %p268 = scmp.eq.s32.totalorder %s30, 3
      %p269 = por %p267, %p268
      %p270 = scmp.ne.s32.totalorder %s262, %s265
      %p271 = scmp.eq.s32.totalorder %s30, 0
      %p272 = por %p270, %p271
      %p273 = scmp.ne.s32.totalorder %s262, %s265
      %p274 = scmp.eq.s32.totalorder %s35, 3
      %p275 = por %p273, %p274
      %p276 = scmp.ne.s32.totalorder %s265, %s266
      %p277 = scmp.eq.s32.totalorder %s35, 0
      %p278 = por %p276, %p277
      %p279 = scmp.ne.s32.totalorder %s265, %s266
      %p280 = scmp.eq.s32.totalorder %s36, 3
      %p281 = por %p279, %p280
      %p283 = scmp.ne.s32.totalorder %s266, %s282
      %p284 = scmp.eq.s32.totalorder %s36, 0
      %p285 = por %p283, %p284
      %s286 = ssub.s32 %s37, %s49
      %s287 = ssub.s32 %s38, %s45
      %s288 = sor.u32 %s286, %s287
      %p289 = scmp.eq.s32.totalorder %s288, 0
      %s291 = sadd.s32 %s290, 1
      %s292 = scalar_select %p289, %s290, %s291
      %p295 = pneg %p289
      %p296 = scmp.eq.s32.totalorder %s30, 3
      %p297 = por %p295, %p296
      %p298 = scmp.ne.s32.totalorder %s290, %s293
      %p299 = scmp.eq.s32.totalorder %s30, 0
      %p300 = por %p298, %p299
      %p301 = scmp.ne.s32.totalorder %s290, %s293
      %p302 = scmp.eq.s32.totalorder %s35, 3
      %p303 = por %p301, %p302
      %p304 = scmp.ne.s32.totalorder %s293, %s294
      %p305 = scmp.eq.s32.totalorder %s35, 0
      %p306 = por %p304, %p305
      %p307 = scmp.ne.s32.totalorder %s293, %s294
      %p308 = scmp.eq.s32.totalorder %s36, 3
      %p309 = por %p307, %p308
      %p311 = scmp.ne.s32.totalorder %s294, %s310
      %p312 = scmp.eq.s32.totalorder %s36, 0
      %p313 = por %p311, %p312
      %p314 = scmp.le.s32.totalorder 1, %s30
      %p315 = scmp.lt.s32.totalorder %s30, 5
      %p316 = pnand %p314, %p315
      %p317 = pneg %p316
      // Predicated region
      $region9: #{tpu_custom_call.1} parent=5 // pred_check
        _
      $region10: #{tpu_custom_call.1} parent=5 // pred_check_branch
        %319 = sbr.rel (%p316) target = $region12
      $region11: #{tpu_custom_call.1} parent=5 // pred_region
        %s320 = ssub.s32 %s30, 1
        // Predicated region
        $region13: #{tpu_custom_call.1} parent=11 // pred_check
          %p321 = pneg %p89
        $region14: #{tpu_custom_call.1} parent=11 // pred_check_branch
          %323 = sbr.rel (%p321) target = $region16
        $region15: #{tpu_custom_call.1} parent=11 // pred_region
          %s325 = ssub.s32 64, 64
          %326 = vsyncadd [#allocation7], %s325
          %s328 = sshll.u32 [#allocation6], 4
          %s329 = int_to_ptr.vmem [resolvable:$true] %s328
          %331 = dma.hbm_to_vmem [thread:$0]  %s1, 64, %s329, [#allocation7]
        $region16: #{tpu_custom_call.1} parent=11 // pred_fallthru
          _
        // Predicated region
        $region17: #{tpu_custom_call.1} parent=11 // pred_check
          %p332 = pneg %p110
        $region18: #{tpu_custom_call.1} parent=11 // pred_check_branch
          %334 = sbr.rel (%p332) target = $region20
        $region19: #{tpu_custom_call.1} parent=11 // pred_region
          _
        $region20: #{tpu_custom_call.1} parent=11 // pred_fallthru
          _
        // Predicated region
        $region21: #{tpu_custom_call.1} parent=11 // pred_check
          %p335 = pneg %p131
        $region22: #{tpu_custom_call.1} parent=11 // pred_check_branch
          %337 = sbr.rel (%p335) target = $region24
        $region23: #{tpu_custom_call.1} parent=11 // pred_region
          _
        $region24: #{tpu_custom_call.1} parent=11 // pred_fallthru
          _
        // Predicated region
        $region25: #{tpu_custom_call.1} parent=11 // pred_check
          %p338 = pneg %p152
        $region26: #{tpu_custom_call.1} parent=11 // pred_check_branch
          %340 = sbr.rel (%p338) target = $region28
        $region27: #{tpu_custom_call.1} parent=11 // pred_region
          _
        $region28: #{tpu_custom_call.1} parent=11 // pred_fallthru
          _
        // Predicated region
        $region29: #{tpu_custom_call.1} parent=11 // pred_check
          %p341 = pneg %p173
        $region30: #{tpu_custom_call.1} parent=11 // pred_check_branch
          %343 = sbr.rel (%p341) target = $region32
        $region31: #{tpu_custom_call.1} parent=11 // pred_region
          _
        $region32: #{tpu_custom_call.1} parent=11 // pred_fallthru
          _
        // Predicated region
        $region33: #{tpu_custom_call.1} parent=11 // pred_check
          %p344 = pneg %p194
        $region34: #{tpu_custom_call.1} parent=11 // pred_check_branch
          %346 = sbr.rel (%p344) target = $region36
        $region35: #{tpu_custom_call.1} parent=11 // pred_region
          _
        $region36: #{tpu_custom_call.1} parent=11 // pred_fallthru
          _
      $region12: #{tpu_custom_call.1} parent=5 // pred_fallthru
        _
      %p347 = scmp.lt.s32.totalorder %s30, 4
      // Predicated region
      $region37: #{tpu_custom_call.1} parent=5 // pred_check
        %p348 = pneg %p347
      $region38: #{tpu_custom_call.1} parent=5 // pred_check_branch
        %350 = sbr.rel (%p348) target = $region40
      $region39: #{tpu_custom_call.1} parent=5 // pred_region
        // Predicated region
        $region41: #{tpu_custom_call.1} parent=39 // pred_check
          %p351 = pneg %p62
        $region42: #{tpu_custom_call.1} parent=39 // pred_check_branch
          %353 = sbr.rel (%p351) target = $region44
        $region43: #{tpu_custom_call.1} parent=39 // pred_region
          %s354 = sand.u32 %s52, 1
          %s355 = scalar_lea.sflag [#allocation4], %s354
          %s356 = sand.u32 %s52, 1
          %s357 = smul.addr %s356, 64
          %s358 = scalar_lea.vmem [#allocation3], %s357
          %s360 = ssub.s32 1024, 1024
          %361 = vsyncadd %s355, %s360
          %s362 = smul.addr %s37, 8
          %s363 = smul.addr %s362, 128
          %s364 = scalar_lea.hbm %s0, %s363
          %s365 = sshll.u32 %s358, 4
          %s366 = int_to_ptr.vmem [resolvable:$true] %s365
          %371 = dma.hbm_to_vmem [thread:$0]  %s364, 1024, %s366, %s355, 128, 128, 8
        $region44: #{tpu_custom_call.1} parent=39 // pred_fallthru
          _
      $region40: #{tpu_custom_call.1} parent=5 // pred_fallthru
        _
      %p372 = scmp.le.s32.totalorder 1, %s30
      %p373 = scmp.lt.s32.totalorder %s30, 5
      %p374 = pnand %p372, %p373
      %p375 = pneg %p374
      // Predicated region
      $region45: #{tpu_custom_call.1} parent=5 // pred_check
        _
      $region46: #{tpu_custom_call.1} parent=5 // pred_check_branch
        %377 = sbr.rel (%p374) target = $region48
      $region47: #{tpu_custom_call.1} parent=5 // pred_region
        %s378 = ssub.s32 %s30, 1
        %s379 = sand.u32 %s55, 1
        %s380 = scalar_lea.sflag [#allocation4], %s379
        %s381 = sand.u32 %s55, 1
        %s382 = smul.addr %s381, 64
        %s383 = scalar_lea.vmem [#allocation3], %s382
        // Predicated region
        $region49: #{tpu_custom_call.1} parent=47 // pred_check
          %p384 = pneg %p68
        $region50: #{tpu_custom_call.1} parent=47 // pred_check_branch
          %386 = sbr.rel (%p384) target = $region52
        $region51: #{tpu_custom_call.1} parent=47 // pred_region
          %387 = dma.done %s380, 1024
        $region52: #{tpu_custom_call.1} parent=47 // pred_fallthru
          _
        // Predicated region
        $region53: #{tpu_custom_call.1} parent=47 // pred_check
          %p388 = pneg %p89
        $region54: #{tpu_custom_call.1} parent=47 // pred_check_branch
          %390 = sbr.rel (%p388) target = $region56
        $region55: #{tpu_custom_call.1} parent=47 // pred_region
          %391 = dma.done [#allocation7], 64
        $region56: #{tpu_custom_call.1} parent=47 // pred_fallthru
          _
        %s392 = sand.u32 %s55, 1
        %s393 = scalar_lea.sflag [#allocation4], %s392
        %s394 = sand.u32 %s55, 1
        %s395 = smul.addr %s394, 64
        %s396 = scalar_lea.vmem [#allocation3], %s395
        %p397 = pneg %p68
        %p398 = pneg %p65
        %p399 = pneg %p89
        %p400 = pneg %p86
        %p401 = pneg %p110
        %p402 = pneg %p107
        %p403 = pneg %p131
        %p404 = pneg %p128
        %p405 = pneg %p152
        %p406 = pneg %p149
        %p407 = pneg %p173
        %p408 = pneg %p170
        %p409 = pneg %p194
        %p410 = pneg %p191
        %p411 = pneg %p222
        %p412 = pneg %p219
        %s413 = sand.u32 %s209, 1
        %s414 = scalar_lea.sflag [#allocation5], %s413
        %s415 = sand.u32 %s209, 1
        %s416 = smul.addr %s415, 128
        %s417 = scalar_lea.vmem [#allocation8], %s416
        %p418 = pneg %p250
        %p419 = pneg %p247
        %s420 = sand.u32 %s35, 1
        %s421 = scalar_lea.sflag [#allocation10], %s420
        %s422 = sand.u32 %s237, 1
        %s423 = smul.addr %s422, 128
        %s424 = scalar_lea.vmem [#allocation9], %s423
        %p425 = pneg %p278
        %p426 = pneg %p275
        %s427 = sand.u32 %s35, 1
        %s428 = scalar_lea.sflag [#allocation10], %s427
        %s429 = sand.u32 %s265, 1
        %s430 = smul.addr %s429, 8
        %s431 = scalar_lea.vmem [#allocation11], %s430
        %p432 = pneg %p306
        %p433 = pneg %p303
        %s434 = sand.u32 %s293, 1
        %s435 = scalar_lea.sflag [#allocation13], %s434
        %s436 = sand.u32 %s293, 1
        %s437 = smul.addr %s436, 8
        %s438 = scalar_lea.vmem [#allocation12], %s437
        %s439 = smul.u32 8, %s40
        %s440 = smul.u32 8, %s40
        %s441 = smul.u32 %s40, 8
        %s442 = ssub.s32 %s441, 1
        %v443 = vld [vmem:[#allocation6] sm:$0xf]
        %v444 = vld [vmem:[%s2] sm:$0x1]
        %v445 = vld [vmem:[%s3] sm:$0x7]
        %v446 = vld [vmem:[%s5] sm:$0x7]
        %vm447 = vcmask 122880
        %448 = vst.msk [vmem:[#allocation2 + $0x7] sm:$0x1] %vm447, 0.0
        %449 = vst.msk [vmem:[#allocation2 + $0x27] sm:$0x1] %vm447, 0.0
        %450 = vst.msk [vmem:[#allocation2 + $0x47] sm:$0x1] %vm447, 0.0
        %451 = vst.msk [vmem:[#allocation2 + $0x67] sm:$0x1] %vm447, 0.0
        %452 = vst.msk [vmem:[#allocation2 + $0x87] sm:$0x1] %vm447, 0.0
        %453 = vst.msk [vmem:[#allocation2 + $0xa7] sm:$0x1] %vm447, 0.0
        %454 = vst.msk [vmem:[#allocation2 + $0xc7] sm:$0x1] %vm447, 0.0
        %455 = vst.msk [vmem:[#allocation2 + $0xe7] sm:$0x1] %vm447, 0.0
        %456 = vst.msk [vmem:[#allocation2 + $0x107] sm:$0x1] %vm447, 0.0
        %457 = vst.msk [vmem:[#allocation2 + $0x127] sm:$0x1] %vm447, 0.0
        %458 = vst.msk [vmem:[#allocation2 + $0x18] sm:$0x1] %vm447, 0.0
        %459 = vst.msk [vmem:[#allocation2 + $0x38] sm:$0x1] %vm447, 0.0
        %460 = vst.msk [vmem:[#allocation2 + $0x58] sm:$0x1] %vm447, 0.0
        %461 = vst.msk [vmem:[#allocation2 + $0x78] sm:$0x1] %vm447, 0.0
        %462 = vst.msk [vmem:[#allocation2 + $0x98] sm:$0x1] %vm447, 0.0
        %463 = vst.msk [vmem:[#allocation2 + $0xb8] sm:$0x1] %vm447, 0.0
        %464 = vst.msk [vmem:[#allocation2 + $0xd8] sm:$0x1] %vm447, 0.0
        %465 = vst.msk [vmem:[#allocation2 + $0xf8] sm:$0x1] %vm447, 0.0
        %466 = vst.msk [vmem:[#allocation2 + $0x118] sm:$0x1] %vm447, 0.0
        %467 = vst.msk [vmem:[#allocation2 + $0x138] sm:$0x1] %vm447, 0.0
        %s468 = scalar_lea.vmem %s383, %s441 [#allocation3]
        %v469 = vld [vmem:[%s468] sm:$0xff]
        %v470 = vld [vmem:[%s468 + $0x10] sm:$0xff]
        %v471 = vld [vmem:[%s468 + $0x20] sm:$0xff]
        %v472 = vld [vmem:[%s468 + $0x30] sm:$0xff]
        %v473 = vcombine.low %v469, %v471
        %v474 = vcombine.high %v469, %v471
        %v476 = vunpack.c.l.s4 1983009808
        %v477 = vunpack.c.0.s8 %v476
        %v478 = vlaneseq
        %v479 = vshrl.u32 %v478, 7
        %v480 = vsub.s32 %v477, %v479
        %v481 = vrot.slane %v473, %v480
        %v483 = vunpack.c.l.s4 1983009808
        %v484 = vunpack.c.0.s8 %v483
        %v485 = vlaneseq
        %v486 = vshrl.u32 %v485, 7
        %v487 = vsub.s32 %v484, %v486
        %v488 = vrot.slane %v474, %v487
        %v489 = vcombine.low %v470, %v472
        %v490 = vcombine.high %v470, %v472
        %v492 = vunpack.c.l.s4 1983009808
        %v493 = vunpack.c.0.s8 %v492
        %v494 = vlaneseq
        %v495 = vshrl.u32 %v494, 7
        %v496 = vsub.s32 %v493, %v495
        %v497 = vrot.slane %v489, %v496
        %v499 = vunpack.c.l.s4 1983009808
        %v500 = vunpack.c.0.s8 %v499
        %v501 = vlaneseq
        %v502 = vshrl.u32 %v501, 7
        %v503 = vsub.s32 %v500, %v502
        %v504 = vrot.slane %v490, %v503
        %v505 = vcombine.low %v481, %v497
        %v506 = vcombine.high %v481, %v497
        %v508 = vunpack.c.l.s4 1934713408
        %v509 = vunpack.c.0.s8 %v508
        %v510 = vlaneseq
        %v511 = vshrl.u32 %v510, 7
        %v512 = vsub.s32 %v509, %v511
        %v513 = vrot.slane %v505, %v512
        %v515 = vunpack.c.l.s4 1934713408
        %v516 = vunpack.c.0.s8 %v515
        %v517 = vlaneseq
        %v518 = vshrl.u32 %v517, 7
        %v519 = vsub.s32 %v516, %v518
        %v520 = vrot.slane %v506, %v519
        %v521 = vcombine.low %v488, %v504
        %v522 = vcombine.high %v488, %v504
        %v524 = vunpack.c.l.s4 1934713408
        %v525 = vunpack.c.0.s8 %v524
        %v526 = vlaneseq
        %v527 = vshrl.u32 %v526, 7
        %v528 = vsub.s32 %v525, %v527
        %v529 = vrot.slane %v521, %v528
        %v531 = vunpack.c.l.s4 1934713408
        %v532 = vunpack.c.0.s8 %v531
        %v533 = vlaneseq
        %v534 = vshrl.u32 %v533, 7
        %v535 = vsub.s32 %v532, %v534
        %v536 = vrot.slane %v522, %v535
        %v537 = vcombine.high %v513, 0.0
        %v538 = vcombine.high %v520, 0.0
        %v539 = vcombine.high %v529, 0.0
        %v540 = vcombine.high %v536, 0.0
        %542 = vrot.lane.b32.xlu0 %v537, 16
        %v543 = vpop.permute.xlu0 %542
        %546 = vrot.lane.b32.xlu0 %v520, 32
        %v547 = vpop.permute.xlu0 %546
        %550 = vrot.lane.b32.xlu0 %v538, 48
        %v551 = vpop.permute.xlu0 %550
        %554 = vrot.lane.b32.xlu0 %v529, 64
        %v555 = vpop.permute.xlu0 %554
        %558 = vrot.lane.b32.xlu0 %v539, 80
        %v559 = vpop.permute.xlu0 %558
        %562 = vrot.lane.b32.xlu0 %v536, 96
        %v563 = vpop.permute.xlu0 %562
        %566 = vrot.lane.b32.xlu0 %v540, 112
        %v567 = vpop.permute.xlu0 %566
        %vm569 = vcmask 130048
        %v570 = vsel %vm569, %v513, %v543
        %vm571 = vcmask 261120
        %v572 = vsel %vm571, %v570, %v547
        %vm573 = vcmask 392192
        %v574 = vsel %vm573, %v572, %v551
        %vm575 = vcmask 523264
        %v576 = vsel %vm575, %v574, %v555
        %vm577 = vcmask 654336
        %v578 = vsel %vm577, %v576, %v559
        %vm579 = vcmask 785408
        %v580 = vsel %vm579, %v578, %v563
        %vm581 = vcmask 916480
        %v582 = vsel %vm581, %v580, %v567
        %v584 = vlaneseq
        %v585 = vshrl.u32 %v584, 7
        %v586 = vsub.s32 0, %v585
        %v587 = vrot.slane %v444, %v586
        %589 = vxpose.xlu0.b32.start [1/16] %v582, 128
        %590 = vxpose.xlu0.b32.cont [2/16] 0.0, 128
        %591 = vxpose.xlu0.b32.cont [3/16] 0.0, 128
        %592 = vxpose.xlu0.b32.cont [4/16] 0.0, 128
        %593 = vxpose.xlu0.b32.cont [5/16] 0.0, 128
        %594 = vxpose.xlu0.b32.cont [6/16] 0.0, 128
        %595 = vxpose.xlu0.b32.cont [7/16] 0.0, 128
        %596 = vxpose.xlu0.b32.cont [8/16] 0.0, 128
        %597 = vxpose.xlu0.b32.cont [9/16] 0.0, 128
        %598 = vxpose.xlu0.b32.cont [10/16] 0.0, 128
        %599 = vxpose.xlu0.b32.cont [11/16] 0.0, 128
        %600 = vxpose.xlu0.b32.cont [12/16] 0.0, 128
        %601 = vxpose.xlu0.b32.cont [13/16] 0.0, 128
        %602 = vxpose.xlu0.b32.cont [14/16] 0.0, 128
        %603 = vxpose.xlu0.b32.cont [15/16] 0.0, 128
        %604 = vxpose.xlu0.b32.end [16/16] 0.0, 128
        %v605 = vpop.trf.xlu0
        %v606 = vpop.trf.xlu0
        %v607 = vpop.trf.xlu0
        %v608 = vpop.trf.xlu0
        %v609 = vpop.trf.xlu0
        %v610 = vpop.trf.xlu0
        %v611 = vpop.trf.xlu0
        %v612 = vpop.trf.xlu0
        %v613 = vpop.trf.xlu0
        %v614 = vpop.trf.xlu0
        %v615 = vpop.trf.xlu0
        %v616 = vpop.trf.xlu0
        %v617 = vpop.trf.xlu0
        %v618 = vpop.trf.xlu0
        %v619 = vpop.trf.xlu0
        %v620 = vpop.trf.xlu0
        %vm621 = vcmask 31744
        %v623 = vsel %vm621, %v605, 0
        %v626 = vsel %vm621, %v606, 0
        %v629 = vsel %vm621, %v607, 0
        %v632 = vsel %vm621, %v608, 0
        %v635 = vsel %vm621, %v609, 0
        %v638 = vsel %vm621, %v610, 0
        %v641 = vsel %vm621, %v611, 0
        %v644 = vsel %vm621, %v612, 0
        %v647 = vsel %vm621, %v613, 0
        %v650 = vsel %vm621, %v614, 0
        %v653 = vsel %vm621, %v615, 0
        %v656 = vsel %vm621, %v616, 0
        %v659 = vsel %vm621, %v617, 0
        %v662 = vsel %vm621, %v618, 0
        %v665 = vsel %vm621, %v619, 0
        %v668 = vsel %vm621, %v620, 0
        %vm670 = vcmask 1043456
        %v672 = vsel %vm670, %v443, 0
        %674 = vmatprep.subr.mxu0 0.0
        %675 = vmatpush1.msra.mxu0 %v672
        %676 = vmatprep.subr.mxu0 0.0
        %677 = vmatpush1.msra.mxu0 0.0
        %678 = vmatprep.subr.mxu0 0.0
        %679 = vmatpush1.msra.mxu0 0.0
        %680 = vmatprep.subr.mxu0 0.0
        %681 = vmatpush1.msra.mxu0 0.0
        %682 = vmatprep.subr.mxu0 0.0
        %683 = vmatpush1.msra.mxu0 0.0
        %684 = vmatprep.subr.mxu0 0.0
        %685 = vmatpush1.msra.mxu0 0.0
        %686 = vmatprep.subr.mxu0 0.0
        %687 = vmatpush1.msra.mxu0 0.0
        %688 = vmatprep.subr.mxu0 0.0
        %689 = vmatpush1.msra.mxu0 0.0
        %690 = vmatprep.subr.mxu0 0.0
        %691 = vmatpush1.msra.mxu0 0.0
        %692 = vmatprep.subr.mxu0 0.0
        %693 = vmatpush1.msra.mxu0 0.0
        %694 = vmatprep.subr.mxu0 0.0
        %695 = vmatpush1.msra.mxu0 0.0
        %696 = vmatprep.subr.mxu0 0.0
        %697 = vmatpush1.msra.mxu0 0.0
        %698 = vmatprep.subr.mxu0 0.0
        %699 = vmatpush1.msra.mxu0 0.0
        %700 = vmatprep.subr.mxu0 0.0
        %701 = vmatpush1.msra.mxu0 0.0
        %702 = vmatprep.subr.mxu0 0.0
        %703 = vmatpush1.msra.mxu0 0.0
        %704 = vmatprep.subr.mxu0 0.0
        %705 = vmatpush1.msra.mxu0 0.0
        %706 = vmatprep.subr.mxu0 0.0
        %707 = vmatpush1.msra.mxu0 0.0
        %708 = vmatprep.subr.mxu0 0.0
        %709 = vmatpush1.msra.mxu0 0.0
        %710 = vmatprep.subr.mxu0 0.0
        %711 = vmatpush1.msra.mxu0 0.0
        %712 = vmatprep.subr.mxu0 0.0
        %713 = vmatpush1.msra.mxu0 0.0
        %714 = vmatprep.subr.mxu0 0.0
        %715 = vmatpush1.msra.mxu0 0.0
        %716 = vmatprep.subr.mxu0 0.0
        %717 = vmatpush1.msra.mxu0 0.0
        %718 = vmatprep.subr.mxu0 0.0
        %719 = vmatpush1.msra.mxu0 0.0
        %720 = vmatprep.subr.mxu0 0.0
        %721 = vmatpush1.msra.mxu0 0.0
        %722 = vmatprep.subr.mxu0 0.0
        %723 = vmatpush1.msra.mxu0 0.0
        %724 = vmatprep.subr.mxu0 0.0
        %725 = vmatpush1.msra.mxu0 0.0
        %726 = vmatprep.subr.mxu0 0.0
        %727 = vmatpush1.msra.mxu0 0.0
        %728 = vmatprep.subr.mxu0 0.0
        %729 = vmatpush1.msra.mxu0 0.0
        %730 = vmatprep.subr.mxu0 0.0
        %731 = vmatpush1.msra.mxu0 0.0
        %732 = vmatprep.subr.mxu0 0.0
        %733 = vmatpush1.msra.mxu0 0.0
        %734 = vmatprep.subr.mxu0 0.0
        %735 = vmatpush1.msra.mxu0 0.0
        %736 = vmatprep.subr.mxu0 0.0
        %737 = vmatpush1.msra.mxu0 0.0
        %738 = vmatprep.mubr.f32.mxu0 0.0
        %739 = vmatmul.mubr.f32.gmra.mrb[0].mxu0 %v623
        %v740 = vpop.f32.mrb[0].mxu0
        %v741 = vadd.f32 %v587, %v740
        %v742 = vpop.f32.mrb[0].mxu0
        %743 = vmatprep.mubr.f32.mxu0 0.0
        %744 = vmatmul.mubr.f32.gmra.mrb[0].mxu0 %v626
        %v745 = vpop.f32.mrb[0].mxu0
        %v746 = vadd.f32 %v587, %v745
        %v747 = vpop.f32.mrb[0].mxu0
        %748 = vmatprep.mubr.f32.mxu0 0.0
        %749 = vmatmul.mubr.f32.gmra.mrb[0].mxu0 %v629
        %v750 = vpop.f32.mrb[0].mxu0
        %v751 = vadd.f32 %v587, %v750
        %v752 = vpop.f32.mrb[0].mxu0
        %753 = vmatprep.mubr.f32.mxu0 0.0
        %754 = vmatmul.mubr.f32.gmra.mrb[0].mxu0 %v632
        %v755 = vpop.f32.mrb[0].mxu0
        %v756 = vadd.f32 %v587, %v755
        %v757 = vpop.f32.mrb[0].mxu0
        %758 = vmatprep.mubr.f32.mxu0 0.0
        %759 = vmatmul.mubr.f32.gmra.mrb[0].mxu0 %v635
        %v760 = vpop.f32.mrb[0].mxu0
        %v761 = vadd.f32 %v587, %v760
        %v762 = vpop.f32.mrb[0].mxu0
        %763 = vmatprep.mubr.f32.mxu0 0.0
        %764 = vmatmul.mubr.f32.gmra.mrb[0].mxu0 %v638
        %v765 = vpop.f32.mrb[0].mxu0
        %v766 = vadd.f32 %v587, %v765
        %v767 = vpop.f32.mrb[0].mxu0
        %768 = vmatprep.mubr.f32.mxu0 0.0
        %769 = vmatmul.mubr.f32.gmra.mrb[0].mxu0 %v641
        %v770 = vpop.f32.mrb[0].mxu0
        %v771 = vadd.f32 %v587, %v770
        %v772 = vpop.f32.mrb[0].mxu0
        %773 = vmatprep.mubr.f32.mxu0 0.0
        %774 = vmatmul.mubr.f32.gmra.mrb[0].mxu0 %v644
        %v775 = vpop.f32.mrb[0].mxu0
        %v776 = vadd.f32 %v587, %v775
        %v777 = vpop.f32.mrb[0].mxu0
        %778 = vmatprep.mubr.f32.mxu0 0.0
        %779 = vmatmul.mubr.f32.gmra.mrb[0].mxu0 %v647
        %v780 = vpop.f32.mrb[0].mxu0
        %v781 = vadd.f32 %v587, %v780
        %v782 = vpop.f32.mrb[0].mxu0
        %783 = vmatprep.mubr.f32.mxu0 0.0
        %784 = vmatmul.mubr.f32.gmra.mrb[0].mxu0 %v650
        %v785 = vpop.f32.mrb[0].mxu0
        %v786 = vadd.f32 %v587, %v785
        %v787 = vpop.f32.mrb[0].mxu0
        %788 = vmatprep.mubr.f32.mxu0 0.0
        %789 = vmatmul.mubr.f32.gmra.mrb[0].mxu0 %v653
        %v790 = vpop.f32.mrb[0].mxu0
        %v791 = vadd.f32 %v587, %v790
        %v792 = vpop.f32.mrb[0].mxu0
        %793 = vmatprep.mubr.f32.mxu0 0.0
        %794 = vmatmul.mubr.f32.gmra.mrb[0].mxu0 %v656
        %v795 = vpop.f32.mrb[0].mxu0
        %v796 = vadd.f32 %v587, %v795
        %v797 = vpop.f32.mrb[0].mxu0
        %798 = vmatprep.mubr.f32.mxu0 0.0
        %799 = vmatmul.mubr.f32.gmra.mrb[0].mxu0 %v659
        %v800 = vpop.f32.mrb[0].mxu0
        %v801 = vadd.f32 %v587, %v800
        %v802 = vpop.f32.mrb[0].mxu0
        %803 = vmatprep.mubr.f32.mxu0 0.0
        %804 = vmatmul.mubr.f32.gmra.mrb[0].mxu0 %v662
        %v805 = vpop.f32.mrb[0].mxu0
        %v806 = vadd.f32 %v587, %v805
        %v807 = vpop.f32.mrb[0].mxu0
        %808 = vmatprep.mubr.f32.mxu0 0.0
        %809 = vmatmul.mubr.f32.gmra.mrb[0].mxu0 %v665
        %v810 = vpop.f32.mrb[0].mxu0
        %v811 = vadd.f32 %v587, %v810
        %v812 = vpop.f32.mrb[0].mxu0
        %813 = vmatprep.mubr.f32.mxu0 0.0
        %814 = vmatmul.mubr.f32.gmra.mrb[0].mxu0 %v668
        %v815 = vpop.f32.mrb[0].mxu0
        %v816 = vadd.f32 %v587, %v815
        %v817 = vpop.f32.mrb[0].mxu0
        %818 = vdwg.mxu0
        %v819 = vadd.f32 %v741, 3.0
        %v820 = vadd.f32 %v746, 3.0
        %v821 = vadd.f32 %v751, 3.0
        %v822 = vadd.f32 %v756, 3.0
        %v823 = vadd.f32 %v761, 3.0
        %v824 = vadd.f32 %v766, 3.0
        %v825 = vadd.f32 %v771, 3.0
        %v826 = vadd.f32 %v776, 3.0
        %v827 = vadd.f32 %v781, 3.0
        %v828 = vadd.f32 %v786, 3.0
        %v829 = vadd.f32 %v791, 3.0
        %v830 = vadd.f32 %v796, 3.0
        %v831 = vadd.f32 %v801, 3.0
        %v832 = vadd.f32 %v806, 3.0
        %v833 = vadd.f32 %v811, 3.0
        %v834 = vadd.f32 %v816, 3.0
        %v835 = vmax.f32 %v819, 0.0
        %v836 = vmax.f32 %v820, 0.0
        %v837 = vmax.f32 %v821, 0.0
        %v838 = vmax.f32 %v822, 0.0
        %v839 = vmax.f32 %v823, 0.0
        %v840 = vmax.f32 %v824, 0.0
        %v841 = vmax.f32 %v825, 0.0
        %v842 = vmax.f32 %v826, 0.0
        %v843 = vmax.f32 %v827, 0.0
        %v844 = vmax.f32 %v828, 0.0
        %v845 = vmax.f32 %v829, 0.0
        %v846 = vmax.f32 %v830, 0.0
        %v847 = vmax.f32 %v831, 0.0
        %v848 = vmax.f32 %v832, 0.0
        %v849 = vmax.f32 %v833, 0.0
        %v850 = vmax.f32 %v834, 0.0
        %v851 = vmin.f32 %v835, 6.0
        %v852 = vmin.f32 %v836, 6.0
        %v853 = vmin.f32 %v837, 6.0
        %v854 = vmin.f32 %v838, 6.0
        %v855 = vmin.f32 %v839, 6.0
        %v856 = vmin.f32 %v840, 6.0
        %v857 = vmin.f32 %v841, 6.0
        %v858 = vmin.f32 %v842, 6.0
        %v859 = vmin.f32 %v843, 6.0
        %v860 = vmin.f32 %v844, 6.0
        %v861 = vmin.f32 %v845, 6.0
        %v862 = vmin.f32 %v846, 6.0
        %v863 = vmin.f32 %v847, 6.0
        %v864 = vmin.f32 %v848, 6.0
        %v865 = vmin.f32 %v849, 6.0
        %v866 = vmin.f32 %v850, 6.0
        %v867 = vmul.f32 %v741, %v851
        %v868 = vmul.f32 %v746, %v852
        %v869 = vmul.f32 %v751, %v853
        %v870 = vmul.f32 %v756, %v854
        %v871 = vmul.f32 %v761, %v855
        %v872 = vmul.f32 %v766, %v856
        %v873 = vmul.f32 %v771, %v857
        %v874 = vmul.f32 %v776, %v858
        %v875 = vmul.f32 %v781, %v859
        %v876 = vmul.f32 %v786, %v860
        %v877 = vmul.f32 %v791, %v861
        %v878 = vmul.f32 %v796, %v862
        %v879 = vmul.f32 %v801, %v863
        %v880 = vmul.f32 %v806, %v864
        %v881 = vmul.f32 %v811, %v865
        %v882 = vmul.f32 %v816, %v866
        %v883 = vmul.f32 %v867, 0.16666667
        %v884 = vmul.f32 %v868, 0.16666667
        %v885 = vmul.f32 %v869, 0.16666667
        %v886 = vmul.f32 %v870, 0.16666667
        %v887 = vmul.f32 %v871, 0.16666667
        %v888 = vmul.f32 %v872, 0.16666667
        %v889 = vmul.f32 %v873, 0.16666667
        %v890 = vmul.f32 %v874, 0.16666667
        %v891 = vmul.f32 %v875, 0.16666667
        %v892 = vmul.f32 %v876, 0.16666667
        %v893 = vmul.f32 %v877, 0.16666667
        %v894 = vmul.f32 %v878, 0.16666667
        %v895 = vmul.f32 %v879, 0.16666667
        %v896 = vmul.f32 %v880, 0.16666667
        %v897 = vmul.f32 %v881, 0.16666667
        %v898 = vmul.f32 %v882, 0.16666667
        %s899 = scalar_lea.vmem [#allocation2], 32
        %900 = vst.msk [vmem:[%s899 + $0x8] sm:$0xff] %vm569, %v883
        %901 = vst.msk [vmem:[%s899 + $0x10] sm:$0xff] %vm569, %v884
        %902 = vst.msk [vmem:[%s899 + $0x28] sm:$0xff] %vm569, %v885
        %903 = vst.msk [vmem:[%s899 + $0x30] sm:$0xff] %vm569, %v886
        %904 = vst.msk [vmem:[%s899 + $0x48] sm:$0xff] %vm569, %v887
        %905 = vst.msk [vmem:[%s899 + $0x50] sm:$0xff] %vm569, %v888
        %906 = vst.msk [vmem:[%s899 + $0x68] sm:$0xff] %vm569, %v889
        %907 = vst.msk [vmem:[%s899 + $0x70] sm:$0xff] %vm569, %v890
        %908 = vst.msk [vmem:[%s899 + $0x88] sm:$0xff] %vm569, %v891
        %909 = vst.msk [vmem:[%s899 + $0x90] sm:$0xff] %vm569, %v892
        %910 = vst.msk [vmem:[%s899 + $0xa8] sm:$0xff] %vm569, %v893
        %911 = vst.msk [vmem:[%s899 + $0xb0] sm:$0xff] %vm569, %v894
        %912 = vst.msk [vmem:[%s899 + $0xc8] sm:$0xff] %vm569, %v895
        %913 = vst.msk [vmem:[%s899 + $0xd0] sm:$0xff] %vm569, %v896
        %914 = vst.msk [vmem:[%s899 + $0xe8] sm:$0xff] %vm569, %v897
        %915 = vst.msk [vmem:[%s899 + $0xf0] sm:$0xff] %vm569, %v898
        %p916 = scmp.gt.s32.totalorder %s442, 0
        %s917 = scalar_select %p916, %s442, 0
        %p918 = scmp.lt.s32.totalorder %s917, 15
        %s919 = scalar_select %p918, %s917, 15
        %s920 = scalar_lea.vmem %s383, %s919 [#allocation3]
        %v921 = vld [vmem:[%s920] sm:$0x1]
        %v922 = vld [vmem:[%s920 + $0x10] sm:$0x1]
        %v923 = vld [vmem:[%s920 + $0x20] sm:$0x1]
        %v924 = vld [vmem:[%s920 + $0x30] sm:$0x1]
        %v929 = vrot.slane %v922, 7
        %vm930 = vcmask 1041409
        %v931 = vsel %vm930, %v929, %v921
        %v932 = vrot.slane %v923, 6
        %vm933 = vcmask 1042434
        %v934 = vsel %vm933, %v932, %v931
        %v935 = vrot.slane %v924, 5
        %vm936 = vcmask 1043459
        %v937 = vsel %vm936, %v935, %v934
        %939 = vxpose.xlu0.b32.start [1/16] %v937, 128
        %940 = vxpose.xlu0.b32.cont [2/16] 0.0, 128
        %941 = vxpose.xlu0.b32.cont [3/16] 0.0, 128
        %942 = vxpose.xlu0.b32.cont [4/16] 0.0, 128
        %943 = vxpose.xlu0.b32.cont [5/16] 0.0, 128
        %944 = vxpose.xlu0.b32.cont [6/16] 0.0, 128
        %945 = vxpose.xlu0.b32.cont [7/16] 0.0, 128
        %946 = vxpose.xlu0.b32.cont [8/16] 0.0, 128
        %947 = vxpose.xlu0.b32.cont [9/16] 0.0, 128
        %948 = vxpose.xlu0.b32.cont [10/16] 0.0, 128
        %949 = vxpose.xlu0.b32.cont [11/16] 0.0, 128
        %950 = vxpose.xlu0.b32.cont [12/16] 0.0, 128
        %951 = vxpose.xlu0.b32.cont [13/16] 0.0, 128
        %952 = vxpose.xlu0.b32.cont [14/16] 0.0, 128
        %953 = vxpose.xlu0.b32.cont [15/16] 0.0, 128
        %954 = vxpose.xlu0.b32.end [16/16] 0.0, 128
        %v955 = vpop.trf.xlu0
        %v956 = vpop.trf.xlu0
        %v957 = vpop.trf.xlu0
        %v958 = vpop.trf.xlu0
        %v959 = vpop.trf.xlu0
        %v960 = vpop.trf.xlu0
        %v961 = vpop.trf.xlu0
        %v962 = vpop.trf.xlu0
        %v963 = vpop.trf.xlu0
        %v964 = vpop.trf.xlu0
        %v965 = vpop.trf.xlu0
        %v966 = vpop.trf.xlu0
        %v967 = vpop.trf.xlu0
        %v968 = vpop.trf.xlu0
        %v969 = vpop.trf.xlu0
        %v970 = vpop.trf.xlu0
        %v972 = vsel %vm621, %v955, 0
        %v975 = vsel %vm621, %v956, 0
        %977 = vmatprep.subr.mxu0 0.0
        %978 = vmatpush1.msra.mxu0 %v672
        %979 = vmatprep.subr.mxu0 0.0
        %980 = vmatpush1.msra.mxu0 0.0
        %981 = vmatprep.subr.mxu0 0.0
        %982 = vmatpush1.msra.mxu0 0.0
        %983 = vmatprep.subr.mxu0 0.0
        %984 = vmatpush1.msra.mxu0 0.0
        %985 = vmatprep.subr.mxu0 0.0
        %986 = vmatpush1.msra.mxu0 0.0
        %987 = vmatprep.subr.mxu0 0.0
        %988 = vmatpush1.msra.mxu0 0.0
        %989 = vmatprep.subr.mxu0 0.0
        %990 = vmatpush1.msra.mxu0 0.0
        %991 = vmatprep.subr.mxu0 0.0
        %992 = vmatpush1.msra.mxu0 0.0
        %993 = vmatprep.subr.mxu0 0.0
        %994 = vmatpush1.msra.mxu0 0.0
        %995 = vmatprep.subr.mxu0 0.0
        %996 = vmatpush1.msra.mxu0 0.0
        %997 = vmatprep.subr.mxu0 0.0
        %998 = vmatpush1.msra.mxu0 0.0
        %999 = vmatprep.subr.mxu0 0.0
        %1000 = vmatpush1.msra.mxu0 0.0
        %1001 = vmatprep.subr.mxu0 0.0
        %1002 = vmatpush1.msra.mxu0 0.0
        %1003 = vmatprep.subr.mxu0 0.0
        %1004 = vmatpush1.msra.mxu0 0.0
        %1005 = vmatprep.subr.mxu0 0.0
        %1006 = vmatpush1.msra.mxu0 0.0
        %1007 = vmatprep.subr.mxu0 0.0
        %1008 = vmatpush1.msra.mxu0 0.0
        %1009 = vmatprep.subr.mxu0 0.0
        %1010 = vmatpush1.msra.mxu0 0.0
        %1011 = vmatprep.subr.mxu0 0.0
        %1012 = vmatpush1.msra.mxu0 0.0
        %1013 = vmatprep.subr.mxu0 0.0
        %1014 = vmatpush1.msra.mxu0 0.0
        %1015 = vmatprep.subr.mxu0 0.0
        %1016 = vmatpush1.msra.mxu0 0.0
        %1017 = vmatprep.subr.mxu0 0.0
        %1018 = vmatpush1.msra.mxu0 0.0
        %1019 = vmatprep.subr.mxu0 0.0
        %1020 = vmatpush1.msra.mxu0 0.0
        %1021 = vmatprep.subr.mxu0 0.0
        %1022 = vmatpush1.msra.mxu0 0.0
        %1023 = vmatprep.subr.mxu0 0.0
        %1024 = vmatpush1.msra.mxu0 0.0
        %1025 = vmatprep.subr.mxu0 0.0
        %1026 = vmatpush1.msra.mxu0 0.0
        %1027 = vmatprep.subr.mxu0 0.0
        %1028 = vmatpush1.msra.mxu0 0.0
        %1029 = vmatprep.subr.mxu0 0.0
        %1030 = vmatpush1.msra.mxu0 0.0
        %1031 = vmatprep.subr.mxu0 0.0
        %1032 = vmatpush1.msra.mxu0 0.0
        %1033 = vmatprep.subr.mxu0 0.0
        %1034 = vmatpush1.msra.mxu0 0.0
        %1035 = vmatprep.subr.mxu0 0.0
        %1036 = vmatpush1.msra.mxu0 0.0
        %1037 = vmatprep.subr.mxu0 0.0
        %1038 = vmatpush1.msra.mxu0 0.0
        %1039 = vmatprep.subr.mxu0 0.0
        %1040 = vmatpush1.msra.mxu0 0.0
        %1041 = vmatprep.mubr.f32.mxu0 0.0
        %1042 = vmatmul.mubr.f32.gmra.mrb[0].mxu0 %v972
        %v1043 = vpop.f32.mrb[0].mxu0
        %v1044 = vadd.f32 %v587, %v1043
        %v1045 = vpop.f32.mrb[0].mxu0
        %1046 = vmatprep.mubr.f32.mxu0 0.0
        %1047 = vmatmul.mubr.f32.gmra.mrb[0].mxu0 %v975
        %v1048 = vpop.f32.mrb[0].mxu0
        %v1049 = vadd.f32 %v587, %v1048
        %v1050 = vpop.f32.mrb[0].mxu0
        %1051 = vdwg.mxu0
        %v1052 = vadd.f32 %v1044, 3.0
        %v1053 = vadd.f32 %v1049, 3.0
        %v1054 = vmax.f32 %v1052, 0.0
        %v1055 = vmax.f32 %v1053, 0.0
        %v1056 = vmin.f32 %v1054, 6.0
        %v1057 = vmin.f32 %v1055, 6.0
        %v1058 = vmul.f32 %v1044, %v1056
        %v1059 = vmul.f32 %v1049, %v1057
        %v1060 = vmul.f32 %v1058, 0.16666667
        %v1061 = vmul.f32 %v1059, 0.16666667
        %p1062 = scmp.ge.s32.totalorder %s442, 0
        %p1063 = scmp.lt.s32.totalorder %s442, 16
        %p1064 = pnand %p1062, %p1063
        %p1065 = pneg %p1064
        %s1066 = scalar_select %p1065, 1, 0
        %v1067 = vstv %s1066
        %vm1068 = vcmp.eq.s32.totalorder %v1067, 1
        %v1069 = vsel %vm1068, %v1060, 0.0
        %v1070 = vsel %vm1068, %v1061, 0.0
        %1071 = vst.msk [vmem:[#allocation2 + $0x8] sm:$0xff] %vm569, %v1069
        %1072 = vst.msk [vmem:[#allocation2 + $0x10] sm:$0xff] %vm569, %v1070
        %s1073 = sadd.s32 %s441, 8
        %p1074 = scmp.gt.s32.totalorder %s1073, 0
        %s1075 = scalar_select %p1074, %s1073, 0
        %p1076 = scmp.lt.s32.totalorder %s1075, 15
        %s1077 = scalar_select %p1076, %s1075, 15
        %s1078 = scalar_lea.vmem %s383, %s1077 [#allocation3]
        %v1079 = vld [vmem:[%s1078] sm:$0x1]
        %v1080 = vld [vmem:[%s1078 + $0x10] sm:$0x1]
        %v1081 = vld [vmem:[%s1078 + $0x20] sm:$0x1]
        %v1082 = vld [vmem:[%s1078 + $0x30] sm:$0x1]
        %v1087 = vrot.slane %v1080, 7
        %v1088 = vsel %vm930, %v1087, %v1079
        %v1089 = vrot.slane %v1081, 6
        %v1090 = vsel %vm933, %v1089, %v1088
        %v1091 = vrot.slane %v1082, 5
        %v1092 = vsel %vm936, %v1091, %v1090
        %1094 = vxpose.xlu0.b32.start [1/16] %v1092, 128
        %1095 = vxpose.xlu0.b32.cont [2/16] 0.0, 128
        %1096 = vxpose.xlu0.b32.cont [3/16] 0.0, 128
        %1097 = vxpose.xlu0.b32.cont [4/16] 0.0, 128
        %1098 = vxpose.xlu0.b32.cont [5/16] 0.0, 128
        %1099 = vxpose.xlu0.b32.cont [6/16] 0.0, 128
        %1100 = vxpose.xlu0.b32.cont [7/16] 0.0, 128
        %1101 = vxpose.xlu0.b32.cont [8/16] 0.0, 128
        %1102 = vxpose.xlu0.b32.cont [9/16] 0.0, 128
        %1103 = vxpose.xlu0.b32.cont [10/16] 0.0, 128
        %1104 = vxpose.xlu0.b32.cont [11/16] 0.0, 128
        %1105 = vxpose.xlu0.b32.cont [12/16] 0.0, 128
        %1106 = vxpose.xlu0.b32.cont [13/16] 0.0, 128
        %1107 = vxpose.xlu0.b32.cont [14/16] 0.0, 128
        %1108 = vxpose.xlu0.b32.cont [15/16] 0.0, 128
        %1109 = vxpose.xlu0.b32.end [16/16] 0.0, 128
        %v1110 = vpop.trf.xlu0
        %v1111 = vpop.trf.xlu0
        %v1112 = vpop.trf.xlu0
        %v1113 = vpop.trf.xlu0
        %v1114 = vpop.trf.xlu0
        %v1115 = vpop.trf.xlu0
        %v1116 = vpop.trf.xlu0
        %v1117 = vpop.trf.xlu0
        %v1118 = vpop.trf.xlu0
        %v1119 = vpop.trf.xlu0
        %v1120 = vpop.trf.xlu0
        %v1121 = vpop.trf.xlu0
        %v1122 = vpop.trf.xlu0
        %v1123 = vpop.trf.xlu0
        %v1124 = vpop.trf.xlu0
        %v1125 = vpop.trf.xlu0
        %v1127 = vsel %vm621, %v1110, 0
        %v1130 = vsel %vm621, %v1111, 0
        %1132 = vmatprep.subr.mxu0 0.0
        %1133 = vmatpush1.msra.mxu0 %v672
        %1134 = vmatprep.subr.mxu0 0.0
        %1135 = vmatpush1.msra.mxu0 0.0
        %1136 = vmatprep.subr.mxu0 0.0
        %1137 = vmatpush1.msra.mxu0 0.0
        %1138 = vmatprep.subr.mxu0 0.0
        %1139 = vmatpush1.msra.mxu0 0.0
        %1140 = vmatprep.subr.mxu0 0.0
        %1141 = vmatpush1.msra.mxu0 0.0
        %1142 = vmatprep.subr.mxu0 0.0
        %1143 = vmatpush1.msra.mxu0 0.0
        %1144 = vmatprep.subr.mxu0 0.0
        %1145 = vmatpush1.msra.mxu0 0.0
        %1146 = vmatprep.subr.mxu0 0.0
        %1147 = vmatpush1.msra.mxu0 0.0
        %1148 = vmatprep.subr.mxu0 0.0
        %1149 = vmatpush1.msra.mxu0 0.0
        %1150 = vmatprep.subr.mxu0 0.0
        %1151 = vmatpush1.msra.mxu0 0.0
        %1152 = vmatprep.subr.mxu0 0.0
        %1153 = vmatpush1.msra.mxu0 0.0
        %1154 = vmatprep.subr.mxu0 0.0
        %1155 = vmatpush1.msra.mxu0 0.0
        %1156 = vmatprep.subr.mxu0 0.0
        %1157 = vmatpush1.msra.mxu0 0.0
        %1158 = vmatprep.subr.mxu0 0.0
        %1159 = vmatpush1.msra.mxu0 0.0
        %1160 = vmatprep.subr.mxu0 0.0
        %1161 = vmatpush1.msra.mxu0 0.0
        %1162 = vmatprep.subr.mxu0 0.0
        %1163 = vmatpush1.msra.mxu0 0.0
        %1164 = vmatprep.subr.mxu0 0.0
        %1165 = vmatpush1.msra.mxu0 0.0
        %1166 = vmatprep.subr.mxu0 0.0
        %1167 = vmatpush1.msra.mxu0 0.0
        %1168 = vmatprep.subr.mxu0 0.0
        %1169 = vmatpush1.msra.mxu0 0.0
        %1170 = vmatprep.subr.mxu0 0.0
        %1171 = vmatpush1.msra.mxu0 0.0
        %1172 = vmatprep.subr.mxu0 0.0
        %1173 = vmatpush1.msra.mxu0 0.0
        %1174 = vmatprep.subr.mxu0 0.0
        %1175 = vmatpush1.msra.mxu0 0.0
        %1176 = vmatprep.subr.mxu0 0.0
        %1177 = vmatpush1.msra.mxu0 0.0
        %1178 = vmatprep.subr.mxu0 0.0
        %1179 = vmatpush1.msra.mxu0 0.0
        %1180 = vmatprep.subr.mxu0 0.0
        %1181 = vmatpush1.msra.mxu0 0.0
        %1182 = vmatprep.subr.mxu0 0.0
        %1183 = vmatpush1.msra.mxu0 0.0
        %1184 = vmatprep.subr.mxu0 0.0
        %1185 = vmatpush1.msra.mxu0 0.0
        %1186 = vmatprep.subr.mxu0 0.0
        %1187 = vmatpush1.msra.mxu0 0.0
        %1188 = vmatprep.subr.mxu0 0.0
        %1189 = vmatpush1.msra.mxu0 0.0
        %1190 = vmatprep.subr.mxu0 0.0
        %1191 = vmatpush1.msra.mxu0 0.0
        %1192 = vmatprep.subr.mxu0 0.0
        %1193 = vmatpush1.msra.mxu0 0.0
        %1194 = vmatprep.subr.mxu0 0.0
        %1195 = vmatpush1.msra.mxu0 0.0
        %1196 = vmatprep.mubr.f32.mxu0 0.0
        %1197 = vmatmul.mubr.f32.gmra.mrb[0].mxu0 %v1127
        %v1198 = vpop.f32.mrb[0].mxu0
        %v1199 = vadd.f32 %v587, %v1198
        %v1200 = vpop.f32.mrb[0].mxu0
        %1201 = vmatprep.mubr.f32.mxu0 0.0
        %1202 = vmatmul.mubr.f32.gmra.mrb[0].mxu0 %v1130
        %v1203 = vpop.f32.mrb[0].mxu0
        %v1204 = vadd.f32 %v587, %v1203
        %v1205 = vpop.f32.mrb[0].mxu0
        %1206 = vdwg.mxu0
        %v1207 = vadd.f32 %v1199, 3.0
        %v1208 = vadd.f32 %v1204, 3.0
        %v1209 = vmax.f32 %v1207, 0.0
        %v1210 = vmax.f32 %v1208, 0.0
        %v1211 = vmin.f32 %v1209, 6.0
        %v1212 = vmin.f32 %v1210, 6.0
        %v1213 = vmul.f32 %v1199, %v1211
        %v1214 = vmul.f32 %v1204, %v1212
        %v1215 = vmul.f32 %v1213, 0.16666667
        %v1216 = vmul.f32 %v1214, 0.16666667
        %p1217 = scmp.ge.s32.totalorder %s1073, 0
        %p1218 = scmp.lt.s32.totalorder %s1073, 16
        %p1219 = pnand %p1217, %p1218
        %p1220 = pneg %p1219
        %s1221 = scalar_select %p1220, 1, 0
        %v1222 = vstv %s1221
        %vm1223 = vcmp.eq.s32.totalorder %v1222, 1
        %v1224 = vsel %vm1223, %v1215, 0.0
        %v1225 = vsel %vm1223, %v1216, 0.0
        %s1226 = scalar_lea.vmem [#allocation2], 288
        %1227 = vst.msk [vmem:[%s1226 + $0x8] sm:$0xff] %vm569, %v1224
        %1228 = vst.msk [vmem:[%s1226 + $0x10] sm:$0xff] %vm569, %v1225
        %v1229 = vld [vmem:[%s899 + $0x7] sm:$0xff]
        %v1230 = vld [vmem:[%s899 + $0xf] sm:$0xff]
        %v1231 = vld [vmem:[%s899 + $0x27] sm:$0xff]
        %v1232 = vld [vmem:[%s899 + $0x2f] sm:$0xff]
        %v1233 = vld [vmem:[%s899 + $0x47] sm:$0xff]
        %v1234 = vld [vmem:[%s899 + $0x4f] sm:$0xff]
        %v1235 = vld [vmem:[%s899 + $0x67] sm:$0xff]
        %v1236 = vld [vmem:[%s899 + $0x6f] sm:$0xff]
        %v1237 = vld [vmem:[%s899 + $0x87] sm:$0xff]
        %v1238 = vld [vmem:[%s899 + $0x8f] sm:$0xff]
        %v1239 = vld [vmem:[%s899 + $0xa7] sm:$0xff]
        %v1240 = vld [vmem:[%s899 + $0xaf] sm:$0xff]
        %v1241 = vld [vmem:[%s899 + $0xc7] sm:$0xff]
        %v1242 = vld [vmem:[%s899 + $0xcf] sm:$0xff]
        %v1243 = vld [vmem:[%s899 + $0xe7] sm:$0xff]
        %v1244 = vld [vmem:[%s899 + $0xef] sm:$0xff]
        %v1245 = vlaneseq
        %v1246 = vshrl.u32 %v1245, 7
        %v1247 = vsub.s32 0, %v1246
        %v1248 = vrot.slane %v445, %v1247
        %v1249 = vmul.f32 %v1229, %v1248
        %v1250 = vmul.f32 %v1230, %v1248
        %v1251 = vmul.f32 %v1231, %v1248
        %v1252 = vmul.f32 %v1232, %v1248
        %v1253 = vmul.f32 %v1233, %v1248
        %v1254 = vmul.f32 %v1234, %v1248
        %v1255 = vmul.f32 %v1235, %v1248
        %v1256 = vmul.f32 %v1236, %v1248
        %v1257 = vmul.f32 %v1237, %v1248
        %v1258 = vmul.f32 %v1238, %v1248
        %v1259 = vmul.f32 %v1239, %v1248
        %v1260 = vmul.f32 %v1240, %v1248
        %v1261 = vmul.f32 %v1241, %v1248
        %v1262 = vmul.f32 %v1242, %v1248
        %v1263 = vmul.f32 %v1243, %v1248
        %v1264 = vmul.f32 %v1244, %v1248
        %v1265 = vadd.f32 %v1249, 0.0
        %v1266 = vadd.f32 %v1250, 0.0
        %v1267 = vadd.f32 %v1251, 0.0
        %v1268 = vadd.f32 %v1252, 0.0
        %v1269 = vadd.f32 %v1253, 0.0
        %v1270 = vadd.f32 %v1254, 0.0
        %v1271 = vadd.f32 %v1255, 0.0
        %v1272 = vadd.f32 %v1256, 0.0
        %v1273 = vadd.f32 %v1257, 0.0
        %v1274 = vadd.f32 %v1258, 0.0
        %v1275 = vadd.f32 %v1259, 0.0
        %v1276 = vadd.f32 %v1260, 0.0
        %v1277 = vadd.f32 %v1261, 0.0
        %v1278 = vadd.f32 %v1262, 0.0
        %v1279 = vadd.f32 %v1263, 0.0
        %v1280 = vadd.f32 %v1264, 0.0
        %v1281 = vld [vmem:[#allocation2 + $0x8] sm:$0xff]
        %v1282 = vld [vmem:[#allocation2 + $0x10] sm:$0xff]
        %v1283 = vld [vmem:[#allocation2 + $0x28] sm:$0xff]
        %v1284 = vld [vmem:[#allocation2 + $0x30] sm:$0xff]
        %v1285 = vld [vmem:[#allocation2 + $0x48] sm:$0xff]
        %v1286 = vld [vmem:[#allocation2 + $0x50] sm:$0xff]
        %v1287 = vld [vmem:[#allocation2 + $0x68] sm:$0xff]
        %v1288 = vld [vmem:[#allocation2 + $0x70] sm:$0xff]
        %v1289 = vld [vmem:[#allocation2 + $0x88] sm:$0xff]
        %v1290 = vld [vmem:[#allocation2 + $0x90] sm:$0xff]
        %v1291 = vld [vmem:[#allocation2 + $0xa8] sm:$0xff]
        %v1292 = vld [vmem:[#allocation2 + $0xb0] sm:$0xff]
        %v1293 = vld [vmem:[#allocation2 + $0xc8] sm:$0xff]
        %v1294 = vld [vmem:[#allocation2 + $0xd0] sm:$0xff]
        %v1295 = vld [vmem:[#allocation2 + $0xe8] sm:$0xff]
        %v1296 = vld [vmem:[#allocation2 + $0xf0] sm:$0xff]
        %v1297 = vlaneseq
        %v1298 = vshrl.u32 %v1297, 7
        %v1299 = vsub.s32 0, %v1298
        %v1300 = vrot.slane %v446, %v1299
        %v1301 = vmul.f32 %v1281, %v1300
        %v1302 = vmul.f32 %v1282, %v1300
        %v1303 = vmul.f32 %v1283, %v1300
        %v1304 = vmul.f32 %v1284, %v1300
        %v1305 = vmul.f32 %v1285, %v1300
        %v1306 = vmul.f32 %v1286, %v1300
        %v1307 = vmul.f32 %v1287, %v1300
        %v1308 = vmul.f32 %v1288, %v1300
        %v1309 = vmul.f32 %v1289, %v1300
        %v1310 = vmul.f32 %v1290, %v1300
        %v1311 = vmul.f32 %v1291, %v1300
        %v1312 = vmul.f32 %v1292, %v1300
        %v1313 = vmul.f32 %v1293, %v1300
        %v1314 = vmul.f32 %v1294, %v1300
        %v1315 = vmul.f32 %v1295, %v1300
        %v1316 = vmul.f32 %v1296, %v1300
        %v1317 = vadd.f32 %v1301, 0.0
        %v1318 = vadd.f32 %v1302, 0.0
        %v1319 = vadd.f32 %v1303, 0.0
        %v1320 = vadd.f32 %v1304, 0.0
        %v1321 = vadd.f32 %v1305, 0.0
        %v1322 = vadd.f32 %v1306, 0.0
        %v1323 = vadd.f32 %v1307, 0.0
        %v1324 = vadd.f32 %v1308, 0.0
        %v1325 = vadd.f32 %v1309, 0.0
        %v1326 = vadd.f32 %v1310, 0.0
        %v1327 = vadd.f32 %v1311, 0.0
        %v1328 = vadd.f32 %v1312, 0.0
        %v1329 = vadd.f32 %v1313, 0.0
        %v1330 = vadd.f32 %v1314, 0.0
        %v1331 = vadd.f32 %v1315, 0.0
        %v1332 = vadd.f32 %v1316, 0.0
        %v1333 = vld [vmem:[%s899 + $0x8] sm:$0xff]
        %v1334 = vld [vmem:[%s899 + $0x10] sm:$0xff]
        %v1335 = vld [vmem:[%s899 + $0x28] sm:$0xff]
        %v1336 = vld [vmem:[%s899 + $0x30] sm:$0xff]
        %v1337 = vld [vmem:[%s899 + $0x48] sm:$0xff]
        %v1338 = vld [vmem:[%s899 + $0x50] sm:$0xff]
        %v1339 = vld [vmem:[%s899 + $0x68] sm:$0xff]
        %v1340 = vld [vmem:[%s899 + $0x70] sm:$0xff]
        %v1341 = vld [vmem:[%s899 + $0x88] sm:$0xff]
        %v1342 = vld [vmem:[%s899 + $0x90] sm:$0xff]
        %v1343 = vld [vmem:[%s899 + $0xa8] sm:$0xff]
        %v1344 = vld [vmem:[%s899 + $0xb0] sm:$0xff]
        %v1345 = vld [vmem:[%s899 + $0xc8] sm:$0xff]
        %v1346 = vld [vmem:[%s899 + $0xd0] sm:$0xff]
        %v1347 = vld [vmem:[%s899 + $0xe8] sm:$0xff]
        %v1348 = vld [vmem:[%s899 + $0xf0] sm:$0xff]
        %v1349 = vlaneseq
        %v1350 = vshrl.u32 %v1349, 7
        %v1351 = vsub.s32 1, %v1350
        %v1352 = vrot.slane %v445, %v1351
        %v1353 = vmul.f32 %v1333, %v1352
        %v1354 = vmul.f32 %v1334, %v1352
        %v1355 = vmul.f32 %v1335, %v1352
        %v1356 = vmul.f32 %v1336, %v1352
        %v1357 = vmul.f32 %v1337, %v1352
        %v1358 = vmul.f32 %v1338, %v1352
        %v1359 = vmul.f32 %v1339, %v1352
        %v1360 = vmul.f32 %v1340, %v1352
        %v1361 = vmul.f32 %v1341, %v1352
        %v1362 = vmul.f32 %v1342, %v1352
        %v1363 = vmul.f32 %v1343, %v1352
        %v1364 = vmul.f32 %v1344, %v1352
        %v1365 = vmul.f32 %v1345, %v1352
        %v1366 = vmul.f32 %v1346, %v1352
        %v1367 = vmul.f32 %v1347, %v1352
        %v1368 = vmul.f32 %v1348, %v1352
        %v1369 = vadd.f32 %v1265, %v1353
        %v1370 = vadd.f32 %v1266, %v1354
        %v1371 = vadd.f32 %v1267, %v1355
        %v1372 = vadd.f32 %v1268, %v1356
        %v1373 = vadd.f32 %v1269, %v1357
        %v1374 = vadd.f32 %v1270, %v1358
        %v1375 = vadd.f32 %v1271, %v1359
        %v1376 = vadd.f32 %v1272, %v1360
        %v1377 = vadd.f32 %v1273, %v1361
        %v1378 = vadd.f32 %v1274, %v1362
        %v1379 = vadd.f32 %v1275, %v1363
        %v1380 = vadd.f32 %v1276, %v1364
        %v1381 = vadd.f32 %v1277, %v1365
        %v1382 = vadd.f32 %v1278, %v1366
        %v1383 = vadd.f32 %v1279, %v1367
        %v1384 = vadd.f32 %v1280, %v1368
        %v1385 = vlaneseq
        %v1386 = vshrl.u32 %v1385, 7
        %v1387 = vsub.s32 1, %v1386
        %v1388 = vrot.slane %v446, %v1387
        %v1389 = vmul.f32 %v1333, %v1388
        %v1390 = vmul.f32 %v1334, %v1388
        %v1391 = vmul.f32 %v1335, %v1388
        %v1392 = vmul.f32 %v1336, %v1388
        %v1393 = vmul.f32 %v1337, %v1388
        %v1394 = vmul.f32 %v1338, %v1388
        %v1395 = vmul.f32 %v1339, %v1388
        %v1396 = vmul.f32 %v1340, %v1388
        %v1397 = vmul.f32 %v1341, %v1388
        %v1398 = vmul.f32 %v1342, %v1388
        %v1399 = vmul.f32 %v1343, %v1388
        %v1400 = vmul.f32 %v1344, %v1388
        %v1401 = vmul.f32 %v1345, %v1388
        %v1402 = vmul.f32 %v1346, %v1388
        %v1403 = vmul.f32 %v1347, %v1388
        %v1404 = vmul.f32 %v1348, %v1388
        %v1405 = vadd.f32 %v1317, %v1389
        %v1406 = vadd.f32 %v1318, %v1390
        %v1407 = vadd.f32 %v1319, %v1391
        %v1408 = vadd.f32 %v1320, %v1392
        %v1409 = vadd.f32 %v1321, %v1393
        %v1410 = vadd.f32 %v1322, %v1394
        %v1411 = vadd.f32 %v1323, %v1395
        %v1412 = vadd.f32 %v1324, %v1396
        %v1413 = vadd.f32 %v1325, %v1397
        %v1414 = vadd.f32 %v1326, %v1398
        %v1415 = vadd.f32 %v1327, %v1399
        %v1416 = vadd.f32 %v1328, %v1400
        %v1417 = vadd.f32 %v1329, %v1401
        %v1418 = vadd.f32 %v1330, %v1402
        %v1419 = vadd.f32 %v1331, %v1403
        %v1420 = vadd.f32 %v1332, %v1404
        %v1421 = vld [vmem:[%s899 + $0x9] sm:$0xff]
        %v1422 = vld [vmem:[%s899 + $0x11] sm:$0xff]
        %v1423 = vld [vmem:[%s899 + $0x29] sm:$0xff]
        %v1424 = vld [vmem:[%s899 + $0x31] sm:$0xff]
        %v1425 = vld [vmem:[%s899 + $0x49] sm:$0xff]
        %v1426 = vld [vmem:[%s899 + $0x51] sm:$0xff]
        %v1427 = vld [vmem:[%s899 + $0x69] sm:$0xff]
        %v1428 = vld [vmem:[%s899 + $0x71] sm:$0xff]
        %v1429 = vld [vmem:[%s899 + $0x89] sm:$0xff]
        %v1430 = vld [vmem:[%s899 + $0x91] sm:$0xff]
        %v1431 = vld [vmem:[%s899 + $0xa9] sm:$0xff]
        %v1432 = vld [vmem:[%s899 + $0xb1] sm:$0xff]
        %v1433 = vld [vmem:[%s899 + $0xc9] sm:$0xff]
        %v1434 = vld [vmem:[%s899 + $0xd1] sm:$0xff]
        %v1435 = vld [vmem:[%s899 + $0xe9] sm:$0xff]
        %v1436 = vld [vmem:[%s899 + $0xf1] sm:$0xff]
        %v1437 = vlaneseq
        %v1438 = vshrl.u32 %v1437, 7
        %v1439 = vsub.s32 2, %v1438
        %v1440 = vrot.slane %v445, %v1439
        %v1441 = vmul.f32 %v1421, %v1440
        %v1442 = vmul.f32 %v1422, %v1440
        %v1443 = vmul.f32 %v1423, %v1440
        %v1444 = vmul.f32 %v1424, %v1440
        %v1445 = vmul.f32 %v1425, %v1440
        %v1446 = vmul.f32 %v1426, %v1440
        %v1447 = vmul.f32 %v1427, %v1440
        %v1448 = vmul.f32 %v1428, %v1440
        %v1449 = vmul.f32 %v1429, %v1440
        %v1450 = vmul.f32 %v1430, %v1440
        %v1451 = vmul.f32 %v1431, %v1440
        %v1452 = vmul.f32 %v1432, %v1440
        %v1453 = vmul.f32 %v1433, %v1440
        %v1454 = vmul.f32 %v1434, %v1440
        %v1455 = vmul.f32 %v1435, %v1440
        %v1456 = vmul.f32 %v1436, %v1440
        %v1457 = vadd.f32 %v1369, %v1441
        %v1458 = vadd.f32 %v1370, %v1442
        %v1459 = vadd.f32 %v1371, %v1443
        %v1460 = vadd.f32 %v1372, %v1444
        %v1461 = vadd.f32 %v1373, %v1445
        %v1462 = vadd.f32 %v1374, %v1446
        %v1463 = vadd.f32 %v1375, %v1447
        %v1464 = vadd.f32 %v1376, %v1448
        %v1465 = vadd.f32 %v1377, %v1449
        %v1466 = vadd.f32 %v1378, %v1450
        %v1467 = vadd.f32 %v1379, %v1451
        %v1468 = vadd.f32 %v1380, %v1452
        %v1469 = vadd.f32 %v1381, %v1453
        %v1470 = vadd.f32 %v1382, %v1454
        %v1471 = vadd.f32 %v1383, %v1455
        %v1472 = vadd.f32 %v1384, %v1456
        %s1473 = scalar_lea.vmem [#allocation2], 64
        %v1474 = vld [vmem:[%s1473 + $0x8] sm:$0xff]
        %v1475 = vld [vmem:[%s1473 + $0x10] sm:$0xff]
        %v1476 = vld [vmem:[%s1473 + $0x28] sm:$0xff]
        %v1477 = vld [vmem:[%s1473 + $0x30] sm:$0xff]
        %v1478 = vld [vmem:[%s1473 + $0x48] sm:$0xff]
        %v1479 = vld [vmem:[%s1473 + $0x50] sm:$0xff]
        %v1480 = vld [vmem:[%s1473 + $0x68] sm:$0xff]
        %v1481 = vld [vmem:[%s1473 + $0x70] sm:$0xff]
        %v1482 = vld [vmem:[%s1473 + $0x88] sm:$0xff]
        %v1483 = vld [vmem:[%s1473 + $0x90] sm:$0xff]
        %v1484 = vld [vmem:[%s1473 + $0xa8] sm:$0xff]
        %v1485 = vld [vmem:[%s1473 + $0xb0] sm:$0xff]
        %v1486 = vld [vmem:[%s1473 + $0xc8] sm:$0xff]
        %v1487 = vld [vmem:[%s1473 + $0xd0] sm:$0xff]
        %v1488 = vld [vmem:[%s1473 + $0xe8] sm:$0xff]
        %v1489 = vld [vmem:[%s1473 + $0xf0] sm:$0xff]
        %v1490 = vlaneseq
        %v1491 = vshrl.u32 %v1490, 7
        %v1492 = vsub.s32 2, %v1491
        %v1493 = vrot.slane %v446, %v1492
        %v1494 = vmul.f32 %v1474, %v1493
        %v1495 = vmul.f32 %v1475, %v1493
        %v1496 = vmul.f32 %v1476, %v1493
        %v1497 = vmul.f32 %v1477, %v1493
        %v1498 = vmul.f32 %v1478, %v1493
        %v1499 = vmul.f32 %v1479, %v1493
        %v1500 = vmul.f32 %v1480, %v1493
        %v1501 = vmul.f32 %v1481, %v1493
        %v1502 = vmul.f32 %v1482, %v1493
        %v1503 = vmul.f32 %v1483, %v1493
        %v1504 = vmul.f32 %v1484, %v1493
        %v1505 = vmul.f32 %v1485, %v1493
        %v1506 = vmul.f32 %v1486, %v1493
        %v1507 = vmul.f32 %v1487, %v1493
        %v1508 = vmul.f32 %v1488, %v1493
        %v1509 = vmul.f32 %v1489, %v1493
        %v1510 = vadd.f32 %v1405, %v1494
        %v1511 = vadd.f32 %v1406, %v1495
        %v1512 = vadd.f32 %v1407, %v1496
        %v1513 = vadd.f32 %v1408, %v1497
        %v1514 = vadd.f32 %v1409, %v1498
        %v1515 = vadd.f32 %v1410, %v1499
        %v1516 = vadd.f32 %v1411, %v1500
        %v1517 = vadd.f32 %v1412, %v1501
        %v1518 = vadd.f32 %v1413, %v1502
        %v1519 = vadd.f32 %v1414, %v1503
        %v1520 = vadd.f32 %v1415, %v1504
        %v1521 = vadd.f32 %v1416, %v1505
        %v1522 = vadd.f32 %v1417, %v1506
        %v1523 = vadd.f32 %v1418, %v1507
        %v1524 = vadd.f32 %v1419, %v1508
        %v1525 = vadd.f32 %v1420, %v1509
        %v1526 = vld [vmem:[%s4] sm:$0x1]
        %v1528 = vlaneseq
        %v1529 = vshrl.u32 %v1528, 7
        %v1530 = vsub.s32 0, %v1529
        %v1531 = vrot.slane %v1526, %v1530
        %v1533 = vadd.f32 %v1457, %v1531
        %v1534 = vadd.f32 %v1458, %v1531
        %v1535 = vadd.f32 %v1459, %v1531
        %v1536 = vadd.f32 %v1460, %v1531
        %v1537 = vadd.f32 %v1461, %v1531
        %v1538 = vadd.f32 %v1462, %v1531
        %v1539 = vadd.f32 %v1463, %v1531
        %v1540 = vadd.f32 %v1464, %v1531
        %v1541 = vadd.f32 %v1465, %v1531
        %v1542 = vadd.f32 %v1466, %v1531
        %v1543 = vadd.f32 %v1467, %v1531
        %v1544 = vadd.f32 %v1468, %v1531
        %v1545 = vadd.f32 %v1469, %v1531
        %v1546 = vadd.f32 %v1470, %v1531
        %v1547 = vadd.f32 %v1471, %v1531
        %v1548 = vadd.f32 %v1472, %v1531
        %v1549 = vld [vmem:[%s6] sm:$0x1]
        %v1551 = vlaneseq
        %v1552 = vshrl.u32 %v1551, 7
        %v1553 = vsub.s32 0, %v1552
        %v1554 = vrot.slane %v1549, %v1553
        %v1556 = vadd.f32 %v1510, %v1554
        %v1557 = vadd.f32 %v1511, %v1554
        %v1558 = vadd.f32 %v1512, %v1554
        %v1559 = vadd.f32 %v1513, %v1554
        %v1560 = vadd.f32 %v1514, %v1554
        %v1561 = vadd.f32 %v1515, %v1554
        %v1562 = vadd.f32 %v1516, %v1554
        %v1563 = vadd.f32 %v1517, %v1554
        %v1564 = vadd.f32 %v1518, %v1554
        %v1565 = vadd.f32 %v1519, %v1554
        %v1566 = vadd.f32 %v1520, %v1554
        %v1567 = vadd.f32 %v1521, %v1554
        %v1568 = vadd.f32 %v1522, %v1554
        %v1569 = vadd.f32 %v1523, %v1554
        %v1570 = vadd.f32 %v1524, %v1554
        %v1571 = vadd.f32 %v1525, %v1554
        %1572 = vst.msk [vmem:[%s417] sm:$0xff] %vm569, %v1533
        %1573 = vst.msk [vmem:[%s417 + $0x8] sm:$0xff] %vm569, %v1534
        %1574 = vst.msk [vmem:[%s417 + $0x10] sm:$0xff] %vm569, %v1535
        %1575 = vst.msk [vmem:[%s417 + $0x18] sm:$0xff] %vm569, %v1536
        %1576 = vst.msk [vmem:[%s417 + $0x20] sm:$0xff] %vm569, %v1537
        %1577 = vst.msk [vmem:[%s417 + $0x28] sm:$0xff] %vm569, %v1538
        %1578 = vst.msk [vmem:[%s417 + $0x30] sm:$0xff] %vm569, %v1539
        %1579 = vst.msk [vmem:[%s417 + $0x38] sm:$0xff] %vm569, %v1540
        %1580 = vst.msk [vmem:[%s417 + $0x40] sm:$0xff] %vm569, %v1541
        %1581 = vst.msk [vmem:[%s417 + $0x48] sm:$0xff] %vm569, %v1542
        %1582 = vst.msk [vmem:[%s417 + $0x50] sm:$0xff] %vm569, %v1543
        %1583 = vst.msk [vmem:[%s417 + $0x58] sm:$0xff] %vm569, %v1544
        %1584 = vst.msk [vmem:[%s417 + $0x60] sm:$0xff] %vm569, %v1545
        %1585 = vst.msk [vmem:[%s417 + $0x68] sm:$0xff] %vm569, %v1546
        %1586 = vst.msk [vmem:[%s417 + $0x70] sm:$0xff] %vm569, %v1547
        %1587 = vst.msk [vmem:[%s417 + $0x78] sm:$0xff] %vm569, %v1548
        %1588 = vst.msk [vmem:[%s424] sm:$0xff] %vm569, %v1556
        %1589 = vst.msk [vmem:[%s424 + $0x8] sm:$0xff] %vm569, %v1557
        %1590 = vst.msk [vmem:[%s424 + $0x10] sm:$0xff] %vm569, %v1558
        %1591 = vst.msk [vmem:[%s424 + $0x18] sm:$0xff] %vm569, %v1559
        %1592 = vst.msk [vmem:[%s424 + $0x20] sm:$0xff] %vm569, %v1560
        %1593 = vst.msk [vmem:[%s424 + $0x28] sm:$0xff] %vm569, %v1561
        %1594 = vst.msk [vmem:[%s424 + $0x30] sm:$0xff] %vm569, %v1562
        %1595 = vst.msk [vmem:[%s424 + $0x38] sm:$0xff] %vm569, %v1563
        %1596 = vst.msk [vmem:[%s424 + $0x40] sm:$0xff] %vm569, %v1564
        %1597 = vst.msk [vmem:[%s424 + $0x48] sm:$0xff] %vm569, %v1565
        %1598 = vst.msk [vmem:[%s424 + $0x50] sm:$0xff] %vm569, %v1566
        %1599 = vst.msk [vmem:[%s424 + $0x58] sm:$0xff] %vm569, %v1567
        %1600 = vst.msk [vmem:[%s424 + $0x60] sm:$0xff] %vm569, %v1568
        %1601 = vst.msk [vmem:[%s424 + $0x68] sm:$0xff] %vm569, %v1569
        %1602 = vst.msk [vmem:[%s424 + $0x70] sm:$0xff] %vm569, %v1570
        %1603 = vst.msk [vmem:[%s424 + $0x78] sm:$0xff] %vm569, %v1571
        %v1604 = vsel %vm569, %v1533, 0.0
        %v1605 = vsel %vm569, %v1534, 0.0
        %v1606 = vadd.f32 %v1604, %v1605
        %v1607 = vsel %vm569, %v1535, 0.0
        %v1608 = vadd.f32 %v1606, %v1607
        %v1609 = vsel %vm569, %v1536, 0.0
        %v1610 = vadd.f32 %v1608, %v1609
        %v1611 = vsel %vm569, %v1537, 0.0
        %v1612 = vadd.f32 %v1610, %v1611
        %v1613 = vsel %vm569, %v1538, 0.0
        %v1614 = vadd.f32 %v1612, %v1613
        %v1615 = vsel %vm569, %v1539, 0.0
        %v1616 = vadd.f32 %v1614, %v1615
        %v1617 = vsel %vm569, %v1540, 0.0
        %v1618 = vadd.f32 %v1616, %v1617
        %v1619 = vsel %vm569, %v1541, 0.0
        %v1620 = vadd.f32 %v1618, %v1619
        %v1621 = vsel %vm569, %v1542, 0.0
        %v1622 = vadd.f32 %v1620, %v1621
        %v1623 = vsel %vm569, %v1543, 0.0
        %v1624 = vadd.f32 %v1622, %v1623
        %v1625 = vsel %vm569, %v1544, 0.0
        %v1626 = vadd.f32 %v1624, %v1625
        %v1627 = vsel %vm569, %v1545, 0.0
        %v1628 = vadd.f32 %v1626, %v1627
        %v1629 = vsel %vm569, %v1546, 0.0
        %v1630 = vadd.f32 %v1628, %v1629
        %v1631 = vsel %vm569, %v1547, 0.0
        %v1632 = vadd.f32 %v1630, %v1631
        %v1633 = vsel %vm569, %v1548, 0.0
        %v1634 = vadd.f32 %v1632, %v1633
        %v1635 = vrot.slane %v1634, 4
        %v1636 = vadd.f32 %v1634, %v1635
        %v1637 = vrot.slane %v1636, 2
        %v1638 = vadd.f32 %v1636, %v1637
        %v1639 = vrot.slane %v1638, 1
        %v1640 = vadd.f32 %v1638, %v1639
        %1641 = vst.msk [vmem:[%s431] sm:$0xff] %vm569, %v1640
        %v1642 = vsel %vm569, %v1556, 0.0
        %v1643 = vsel %vm569, %v1557, 0.0
        %v1644 = vadd.f32 %v1642, %v1643
        %v1645 = vsel %vm569, %v1558, 0.0
        %v1646 = vadd.f32 %v1644, %v1645
        %v1647 = vsel %vm569, %v1559, 0.0
        %v1648 = vadd.f32 %v1646, %v1647
        %v1649 = vsel %vm569, %v1560, 0.0
        %v1650 = vadd.f32 %v1648, %v1649
        %v1651 = vsel %vm569, %v1561, 0.0
        %v1652 = vadd.f32 %v1650, %v1651
        %v1653 = vsel %vm569, %v1562, 0.0
        %v1654 = vadd.f32 %v1652, %v1653
        %v1655 = vsel %vm569, %v1563, 0.0
        %v1656 = vadd.f32 %v1654, %v1655
        %v1657 = vsel %vm569, %v1564, 0.0
        %v1658 = vadd.f32 %v1656, %v1657
        %v1659 = vsel %vm569, %v1565, 0.0
        %v1660 = vadd.f32 %v1658, %v1659
        %v1661 = vsel %vm569, %v1566, 0.0
        %v1662 = vadd.f32 %v1660, %v1661
        %v1663 = vsel %vm569, %v1567, 0.0
        %v1664 = vadd.f32 %v1662, %v1663
        %v1665 = vsel %vm569, %v1568, 0.0
        %v1666 = vadd.f32 %v1664, %v1665
        %v1667 = vsel %vm569, %v1569, 0.0
        %v1668 = vadd.f32 %v1666, %v1667
        %v1669 = vsel %vm569, %v1570, 0.0
        %v1670 = vadd.f32 %v1668, %v1669
        %v1671 = vsel %vm569, %v1571, 0.0
        %v1672 = vadd.f32 %v1670, %v1671
        %v1673 = vrot.slane %v1672, 4
        %v1674 = vadd.f32 %v1672, %v1673
        %v1675 = vrot.slane %v1674, 2
        %v1676 = vadd.f32 %v1674, %v1675
        %v1677 = vrot.slane %v1676, 1
        %v1678 = vadd.f32 %v1676, %v1677
        %1679 = vst.msk [vmem:[%s438] sm:$0xff] %vm569, %v1678
        %s1680 = sand.u32 %s209, 1
        %s1681 = scalar_lea.sflag [#allocation5], %s1680
        %s1682 = sand.u32 %s209, 1
        %s1683 = smul.addr %s1682, 128
        %s1684 = scalar_lea.vmem [#allocation8], %s1683
        %s1685 = sand.u32 %s35, 1
        %s1686 = scalar_lea.sflag [#allocation10], %s1685
        %s1687 = sand.u32 %s237, 1
        %s1688 = smul.addr %s1687, 128
        %s1689 = scalar_lea.vmem [#allocation9], %s1688
        %s1690 = sand.u32 %s35, 1
        %s1691 = scalar_lea.sflag [#allocation10], %s1690
        %s1692 = sand.u32 %s265, 1
        %s1693 = smul.addr %s1692, 8
        %s1694 = scalar_lea.vmem [#allocation11], %s1693
        %s1695 = sand.u32 %s293, 1
        %s1696 = scalar_lea.sflag [#allocation13], %s1695
        %s1697 = sand.u32 %s293, 1
        %s1698 = smul.addr %s1697, 8
        %s1699 = scalar_lea.vmem [#allocation12], %s1698
        // Predicated region
        $region57: #{tpu_custom_call.1} parent=47 // pred_check
          %p1700 = pneg %p219
        $region58: #{tpu_custom_call.1} parent=47 // pred_check_branch
          %1702 = sbr.rel (%p1700) target = $region60
        $region59: #{tpu_custom_call.1} parent=47 // pred_region
          %s1703 = smul.u32 8, %s40
          %s1705 = ssub.s32 2048, 2048
          %1706 = vsyncadd %s1681, %s1705
          %s1707 = smul.addr %s1703, 2
          %s1708 = smul.addr %s39, 32
          %s1709 = sadd.s32 %s1707, %s1708
          %s1710 = smul.addr %s1709, 128
          %s1711 = scalar_lea.hbm %s7, %s1710
          %s1712 = sshll.u32 %s1684, 4
          %s1713 = int_to_ptr.vmem [resolvable:$true] %s1712
          %1718 = dma.vmem_to_hbm [thread:$0]  %s1713, 2048, %s1711, %s1681, 128, 128, 8
        $region60: #{tpu_custom_call.1} parent=47 // pred_fallthru
          _
        // Predicated region
        $region61: #{tpu_custom_call.1} parent=47 // pred_check
          %p1719 = pneg %p247
        $region62: #{tpu_custom_call.1} parent=47 // pred_check_branch
          %1721 = sbr.rel (%p1719) target = $region64
        $region63: #{tpu_custom_call.1} parent=47 // pred_region
          %s1722 = smul.u32 8, %s40
          %s1724 = ssub.s32 2048, 2048
          %1725 = vsyncadd %s1686, %s1724
          %s1726 = smul.addr %s1722, 2
          %s1727 = smul.addr %s39, 32
          %s1728 = sadd.s32 %s1726, %s1727
          %s1729 = smul.addr %s1728, 128
          %s1730 = scalar_lea.hbm %s8, %s1729
          %s1731 = sshll.u32 %s1689, 4
          %s1732 = int_to_ptr.vmem [resolvable:$true] %s1731
          %1737 = dma.vmem_to_hbm [thread:$0]  %s1732, 2048, %s1730, %s1686, 128, 128, 8
        $region64: #{tpu_custom_call.1} parent=47 // pred_fallthru
          _
        // Predicated region
        $region65: #{tpu_custom_call.1} parent=47 // pred_check
          %p1738 = pneg %p275
        $region66: #{tpu_custom_call.1} parent=47 // pred_check_branch
          %1740 = sbr.rel (%p1738) target = $region68
        $region67: #{tpu_custom_call.1} parent=47 // pred_region
          %s1742 = ssub.s32 128, 128
          %1743 = vsyncadd %s1691, %s1742
          %s1744 = smul.addr %s39, 2
          %s1745 = sadd.s32 %s40, %s1744
          %s1746 = smul.addr %s1745, 128
          %s1747 = scalar_lea.hbm %s9, %s1746
          %s1749 = sshll.u32 %s1694, 4
          %s1750 = int_to_ptr.vmem [resolvable:$true] %s1749
          %1752 = dma.vmem_to_hbm [thread:$0]  %s1750, 128, %s1747, %s1691
        $region68: #{tpu_custom_call.1} parent=47 // pred_fallthru
          _
        // Predicated region
        $region69: #{tpu_custom_call.1} parent=47 // pred_check
          %p1753 = pneg %p303
        $region70: #{tpu_custom_call.1} parent=47 // pred_check_branch
          %1755 = sbr.rel (%p1753) target = $region72
        $region71: #{tpu_custom_call.1} parent=47 // pred_region
          %s1757 = ssub.s32 128, 128
          %1758 = vsyncadd %s1696, %s1757
          %s1759 = smul.addr %s39, 2
          %s1760 = sadd.s32 %s40, %s1759
          %s1761 = smul.addr %s1760, 128
          %s1762 = scalar_lea.hbm %s10, %s1761
          %s1764 = sshll.u32 %s1699, 4
          %s1765 = int_to_ptr.vmem [resolvable:$true] %s1764
          %1767 = dma.vmem_to_hbm [thread:$0]  %s1765, 128, %s1762, %s1696
        $region72: #{tpu_custom_call.1} parent=47 // pred_fallthru
          _
      $region48: #{tpu_custom_call.1} parent=5 // pred_fallthru
        _
      %p1768 = scmp.le.s32.totalorder 2, %s30
      // Predicated region
      $region73: #{tpu_custom_call.1} parent=5 // pred_check
        %p1769 = pneg %p1768
      $region74: #{tpu_custom_call.1} parent=5 // pred_check_branch
        %1771 = sbr.rel (%p1769) target = $region76
      $region75: #{tpu_custom_call.1} parent=5 // pred_region
        %s1772 = ssub.s32 %s30, 2
        // Predicated region
        $region77: #{tpu_custom_call.1} parent=75 // pred_check
          %p1773 = pneg %p225
        $region78: #{tpu_custom_call.1} parent=75 // pred_check_branch
          %1775 = sbr.rel (%p1773) target = $region80
        $region79: #{tpu_custom_call.1} parent=75 // pred_region
          %s1776 = sand.u32 %s210, 1
          %s1777 = scalar_lea.sflag [#allocation5], %s1776
          %s1778 = sand.u32 %s210, 1
          %s1779 = smul.addr %s1778, 128
          %s1780 = scalar_lea.vmem [#allocation8], %s1779
          %1781 = dma.done %s1777, 2048
        $region80: #{tpu_custom_call.1} parent=75 // pred_fallthru
          _
        // Predicated region
        $region81: #{tpu_custom_call.1} parent=75 // pred_check
          %p1782 = pneg %p253
        $region82: #{tpu_custom_call.1} parent=75 // pred_check_branch
          %1784 = sbr.rel (%p1782) target = $region84
        $region83: #{tpu_custom_call.1} parent=75 // pred_region
          %s1785 = sand.u32 %s36, 1
          %s1786 = scalar_lea.sflag [#allocation10], %s1785
          %s1787 = sand.u32 %s238, 1
          %s1788 = smul.addr %s1787, 128
          %s1789 = scalar_lea.vmem [#allocation9], %s1788
          %1790 = dma.done %s1786, 2048
        $region84: #{tpu_custom_call.1} parent=75 // pred_fallthru
          _
        // Predicated region
        $region85: #{tpu_custom_call.1} parent=75 // pred_check
          %p1791 = pneg %p281
        $region86: #{tpu_custom_call.1} parent=75 // pred_check_branch
          %1793 = sbr.rel (%p1791) target = $region88
        $region87: #{tpu_custom_call.1} parent=75 // pred_region
          %s1794 = sand.u32 %s36, 1
          %s1795 = scalar_lea.sflag [#allocation10], %s1794
          %s1796 = sand.u32 %s266, 1
          %s1797 = smul.addr %s1796, 8
          %s1798 = scalar_lea.vmem [#allocation11], %s1797
          %1799 = dma.done %s1795, 128
        $region88: #{tpu_custom_call.1} parent=75 // pred_fallthru
          _
        // Predicated region
        $region89: #{tpu_custom_call.1} parent=75 // pred_check
          %p1800 = pneg %p309
        $region90: #{tpu_custom_call.1} parent=75 // pred_check_branch
          %1802 = sbr.rel (%p1800) target = $region92
        $region91: #{tpu_custom_call.1} parent=75 // pred_region
          %s1803 = sand.u32 %s294, 1
          %s1804 = scalar_lea.sflag [#allocation13], %s1803
          %s1805 = sand.u32 %s294, 1
          %s1806 = smul.addr %s1805, 8
          %s1807 = scalar_lea.vmem [#allocation12], %s1806
          %1808 = dma.done %s1804, 128
        $region92: #{tpu_custom_call.1} parent=75 // pred_fallthru
          _
      $region76: #{tpu_custom_call.1} parent=5 // pred_fallthru
        _
    $region6: #{tpu_custom_call.1} parent=1 // loop_footer
      %s34 = sadd.s32 1, %s30
    $region7: #{tpu_custom_call.1} parent=1 // loop_footer_branch
      %29 = sbr.rel target = $region3
    $region8: #{tpu_custom_call.1} parent=1 // loop_exit
      _
    %1809 = vsyncpa [#allocation4], 1
    %s1810 = scalar_lea.sflag [#allocation4], 1
    %1811 = vsyncpa %s1810, 1
    %1812 = vsyncpa [#allocation7], 1
    %1813 = vsyncpa [#allocation5], 1
    %s1814 = scalar_lea.sflag [#allocation5], 1
    %1815 = vsyncpa %s1814, 1
    %1816 = vsyncpa [#allocation10], 1
    %s1817 = scalar_lea.sflag [#allocation10], 1
    %1818 = vsyncpa %s1817, 1
    %1819 = vsyncpa [#allocation13], 1
    %s1820 = scalar_lea.sflag [#allocation13], 1
    %1821 = vsyncpa %s1820, 1

</llo_original>
